<compile_context>
chip_gen: v7x
topology: tpu7x:2x2x1
jax: 0.10.0
libtpu: 0.0.40
codegen_flags: <defaults>
</compile_context>

<pallas_src>
import functools

import jax
import jax.numpy as jnp
from jax.experimental import pallas as pl
from jax.experimental.pallas import tpu as pltpu

_MASK_NEG = -1e30  # pre-hinge diagonal mask value for method='max'


def _accumulate_rows(acc_ref, x, tm):
    """Fold (tm, W) rows into the (8, W) accumulator with VALU-only slab adds."""
    if tm % 8 == 0:
        part = x[0:8, :]
        for g in range(1, tm // 8):
            part = part + x[g * 8:(g + 1) * 8, :]
        acc_ref[...] += part
    else:
        # Degenerate fallback (only when N itself is not a multiple of 8).
        acc_ref[0:1, :] += jnp.sum(x, axis=0, keepdims=True)


def _ranking_kernel(*refs, method, fused, tm, n):
    # refs = inputs..., outputs..., scratch
    if fused:
        mcol_ref, mrow_ref, sen_ref, vidt_ref = refs[:4]
        rest = refs[4:]
    else:
        mcol_ref, mrow_ref, sim_ref = refs[:3]
        rest = refs[3:]
    if method == 'max':
        out_sum_ref, out_colmax_ref, acc_ref = rest
    else:
        out_sum_ref, acc_ref = rest

    i = pl.program_id(1)                      # reduction (row-tile) axis
    nsteps = pl.num_programs(1)

    @pl.when(i == 0)
    def _init():
        acc_ref[...] = jnp.zeros_like(acc_ref)
        if method == 'max':
            out_colmax_ref[...] = jnp.zeros_like(out_colmax_ref)

    if fused:
        # Produce the similarity tile on the MXU; hinge applies to MXU output.
        sim = jnp.dot(sen_ref[...], vidt_ref[...],
                      preferred_element_type=jnp.float32)        # (tm, n)
    else:
        sim = sim_ref[...].astype(jnp.float32)                   # (tm, n)

    mcol = mcol_ref[...]   # (tm, 1) : margin - diag  (rows of this tile)
    mrow = mrow_ref[...]   # (1, n)  : margin - diag  (all columns)

    if method == 'max':
        # Mask once, pre-hinge: diagonal -> large negative, both hinges clamp to 0.
        row_tile = pl.program_id(0) * nsteps + i
        g_row = jax.lax.broadcasted_iota(jnp.int32, sim.shape, 0) + row_tile * tm
        g_col = jax.lax.broadcasted_iota(jnp.int32, sim.shape, 1)
        sim = jnp.where(g_row == g_col, jnp.float32(_MASK_NEG), sim)

    loss_sen = jnp.maximum(sim + mcol, 0.0)   # (tm, n)
    loss_vid = jnp.maximum(sim + mrow, 0.0)   # (tm, n)

    if method == 'max':
        row_max = jnp.max(loss_sen, axis=1, keepdims=True)        # (tm, 1)
        _accumulate_rows(acc_ref, row_max, tm)                     # (8, 1) acc
        col_max = jnp.max(loss_vid, axis=0, keepdims=True)         # (1, n)
        out_colmax_ref[...] = jnp.maximum(out_colmax_ref[...],
                                          col_max.reshape(1, 1, n))
    else:
        _accumulate_rows(acc_ref, loss_sen + loss_vid, tm)          # (8, n) acc

    @pl.when(i == nsteps - 1)
    def _finalize():
        total = jnp.sum(acc_ref[...], axis=1, keepdims=True)
        total = jnp.sum(total, axis=0, keepdims=True)               # (1, 1)
        out_sum_ref[...] = total.reshape(1, 1, 1)


def _pick_tm(n, itemsize, budget_bytes=8 * 2**20):
    """Largest multiple-of-8 divisor of n whose double-buffered (tm, n) tile
    fits the VMEM budget; degenerates to tm=n for small matrices."""
    if n % 8 != 0:
        return n
    divisors = [d for d in range(8, n + 1, 8) if n % d == 0]
    fitting = [d for d in divisors if 2 * d * n * itemsize <= budget_bytes]
    return max(fitting) if fitting else min(divisors)


def _launch(*, mcol, mrow, method, tm, n, sim=None, sen=None, vidt=None):
    fused = sim is None
    itemsize = jnp.dtype((sen if fused else sim).dtype).itemsize
    d = sen.shape[1] if fused else 0

    total_tiles = n // tm
    nc = 2 if (total_tiles % 2 == 0 and total_tiles >= 2) else 1   # megacore axis
    steps = total_tiles // nc
    grid = (nc, steps)

    in_specs = [
        pl.BlockSpec((tm, 1), lambda c, i: (c * steps + i, 0)),    # margin - diag (rows)
        pl.BlockSpec((1, n), lambda c, i: (0, 0)),                 # margin - diag (cols)
    ]
    inputs = [mcol, mrow]
    if fused:
        in_specs += [
            pl.BlockSpec((tm, d), lambda c, i: (c * steps + i, 0)),  # sentence tile
            pl.BlockSpec((d, n), lambda c, i: (0, 0)),               # video^T (resident)
        ]
        inputs += [sen, vidt]
    else:
        in_specs.append(pl.BlockSpec((tm, n), lambda c, i: (c * steps + i, 0)))
        inputs.append(sim)

    out_shapes = [jax.ShapeDtypeStruct((nc, 1, 1), jnp.float32)]    # per-core partial sum
    out_specs = [pl.BlockSpec((1, 1, 1), lambda c, i: (c, 0, 0))]
    if method == 'max':
        out_shapes.append(jax.ShapeDtypeStruct((nc, 1, n), jnp.float32))  # per-core colmax
        out_specs.append(pl.BlockSpec((1, 1, n), lambda c, i: (c, 0, 0)))

    scratch = [pltpu.VMEM((8, 1) if method == 'max' else (8, n), jnp.float32)]

    # VMEM estimate: double-buffered input tiles + f32 intermediates + small buffers.
    tile_in = tm * (d if fused else n) * itemsize
    extra_in = d * n * itemsize if fused else 0
    est = 2 * tile_in + 2 * extra_in + 4 * tm * n * 4 + 16 * n * 4 + (2 << 20)
    vmem_limit = int(min(max(est, 32 * 2**20), 48 * 2**20))

    kernel = functools.partial(_ranking_kernel, method=method, fused=fused,
                               tm=tm, n=n)

    outs = pl.pallas_call(
        kernel,
        out_shape=tuple(out_shapes),
        grid_spec=pltpu.PrefetchScalarGridSpec(
            num_scalar_prefetch=0,
            grid=grid,
            in_specs=in_specs,
            out_specs=tuple(out_specs),
            scratch_shapes=scratch),
        compiler_params=pltpu.CompilerParams(
            dimension_semantics=("parallel", "arbitrary"),
            vmem_limit_bytes=vmem_limit),
    )(*inputs)
    if not isinstance(outs, (tuple, list)):
        outs = (outs,)
    return outs


def _combine(outs, *, diag, n, margin, method, improved, intra, lamb):
    if method == 'max':
        partial_sums, colmax = outs
        loss = jnp.sum(partial_sums) + jnp.sum(jnp.max(colmax, axis=0))
    else:
        # Unmasked diagonal contributes exactly max(margin, 0) per element in
        # each of the two hinge matrices -> subtract it back out.
        loss = jnp.sum(outs[0]) - jnp.float32(2.0 * n * max(float(margin), 0.0))
    if improved:
        loss = loss + jnp.float32(lamb) * jnp.sum(
            jnp.maximum(jnp.float32(intra) - diag, 0.0))
    if method == 'sum':
        loss = loss / jnp.float32(n)
    return loss


def pairwise_ranking_loss(matmul_sim, margin=0.01, method='sum',
                          improved=False, intra=0.5, lamb=0.01, tm=None):
    """Matches PairwiseRankingLoss.forward(matmul_sim)."""
    assert matmul_sim.ndim == 2 and matmul_sim.shape[0] == matmul_sim.shape[1]
    assert method in ('sum', 'max')
    n = matmul_sim.shape[0]
    itemsize = jnp.dtype(matmul_sim.dtype).itemsize
    if tm is None:
        tm = _pick_tm(n, itemsize)
    if n % tm != 0 or tm % 8 != 0:
        tm = n  # single full-extent row block

    diag = jnp.diagonal(matmul_sim).astype(jnp.float32)
    mcol = (jnp.float32(margin) - diag).reshape(n, 1)
    mrow = (jnp.float32(margin) - diag).reshape(1, n)

    outs = _launch(mcol=mcol, mrow=mrow, sim=matmul_sim,
                   method=method, tm=tm, n=n)
    return _combine(outs, diag=diag, n=n, margin=margin, method=method,
                    improved=improved, intra=intra, lamb=lamb)


def pairwise_ranking_loss_from_embeddings(sen_emb, vid_emb, margin=0.01,
                                          method='sum', improved=False,
                                          intra=0.5, lamb=0.01, tm=None):
    """Fused producer: similarity tiles built on the MXU inside the kernel; the
    (N, N) similarity matrix never round-trips HBM."""
    assert sen_emb.ndim == 2 and sen_emb.shape == vid_emb.shape
    assert method in ('sum', 'max')
    n, d = sen_emb.shape
    if tm is None:
        tm = _pick_tm(n, 4)  # f32 sim tile dominates the working set
    if n % tm != 0 or tm % 8 != 0:
        tm = n

    diag = jnp.sum(sen_emb.astype(jnp.float32) * vid_emb.astype(jnp.float32),
                   axis=1)
    mcol = (jnp.float32(margin) - diag).reshape(n, 1)
    mrow = (jnp.float32(margin) - diag).reshape(1, n)
    vidt = vid_emb.T  # (d, n); one-off transpose, tiny vs. the N^2 HBM traffic saved

    outs = _launch(mcol=mcol, mrow=mrow, sen=sen_emb, vidt=vidt,
                   method=method, tm=tm, n=n)
    return _combine(outs, diag=diag, n=n, margin=margin, method=method,
                    improved=improved, intra=intra, lamb=lamb)


def _reference(matmul_sim, margin=0.01, method='sum',
               improved=False, intra=0.5, lamb=0.01):
    """Pure-JAX reference mirroring the PyTorch forward."""
    n = matmul_sim.shape[0]
    sim = matmul_sim.astype(jnp.float32)
    pos = jnp.diag(sim).reshape(-1, 1)
    mask = jnp.eye(n, dtype=bool)
    ls = jnp.where(mask, 0.0, jnp.maximum(margin + sim - pos, 0.0))
    lv = jnp.where(mask, 0.0, jnp.maximum(margin + sim - pos.T, 0.0))
    if method == 'max':
        ls = jnp.max(ls, axis=1)
        lv = jnp.max(lv, axis=0)
    loss = ls.sum() + lv.sum()
    if improved:
        loss = loss + lamb * jnp.maximum(intra - jnp.diag(sim), 0.0).sum()
    if method == 'sum':
        loss = loss / jnp.float32(n)
    return loss


if __name__ == "__main__":
    key = jax.random.PRNGKey(0)
    k_sim, k_sen, k_vid = jax.random.split(key, 3)

    N, D = 384, 128
    matmul_sim = jax.random.normal(k_sim, (N, N), dtype=jnp.float32)

    configs = [
        dict(margin=0.01, method='sum', improved=False, intra=0.5, lamb=0.01),
        dict(margin=0.2, method='sum', improved=True, intra=0.5, lamb=0.01),
        dict(margin=0.2, method='max', improved=True, intra=0.5, lamb=0.01),
        dict(margin=0.2, method='max', improved=False, intra=0.5, lamb=0.01),
    ]

    # Precomputed-similarity path (matches the module interface).
    for cfg in configs:
        loss = jax.block_until_ready(pairwise_ranking_loss(matmul_sim, **cfg))
        ref = _reference(matmul_sim, **cfg)
        assert jnp.allclose(loss, ref, atol=1e-4, rtol=1e-5), (cfg, loss, ref)

    # Explicit small tm -> multi-step grid + 2-way (megacore-ready) row split.
    for meth in ('sum', 'max'):
        loss = jax.block_until_ready(
            pairwise_ranking_loss(matmul_sim, tm=64, margin=0.05, method=meth))
        ref = _reference(matmul_sim, margin=0.05, method=meth)
        assert jnp.allclose(loss, ref, atol=1e-4, rtol=1e-5), (meth, loss, ref)

    # Fused-producer path (similarity tiles built on the MXU in-kernel).
    scale = 1.0 / (D ** 0.5)
    sen = jax.random.normal(k_sen, (N, D), dtype=jnp.float32) * scale
    vid = jax.random.normal(k_vid, (N, D), dtype=jnp.float32) * scale
    sim_full = jnp.dot(sen, vid.T)
    for cfg in configs:
        loss = jax.block_until_ready(
            pairwise_ranking_loss_from_embeddings(sen, vid, **cfg))
        ref = _reference(sim_full, **cfg)
        assert jnp.allclose(loss, ref, atol=1e-3, rtol=1e-4), (cfg, loss, ref)
    # Also exercise the fused path with a multi-step grid.
    loss = jax.block_until_ready(
        pairwise_ranking_loss_from_embeddings(sen, vid, tm=128, margin=0.05))
    ref = _reference(sim_full, margin=0.05)
    assert jnp.allclose(loss, ref, atol=1e-3, rtol=1e-4), (loss, ref)

    print("KERNEL_OK")
</pallas_src>

<mosaic_0001>
module attributes {stable_mosaic.version = 11 : i64} {
  func.func @_ranking_kernel(%arg0: i32, %arg1: i32, %arg2: memref<384x1xf32, #tpu.memory_space<vmem>>, %arg3: memref<1x384xf32, #tpu.memory_space<vmem>>, %arg4: memref<384x384xf32, #tpu.memory_space<vmem>>, %arg5: memref<1x1x1xf32, #tpu.memory_space<vmem>>, %arg6: memref<8x384xf32, #tpu.memory_space<vmem>>) attributes {dimension_semantics = [#tpu.dimension_semantics<parallel>, #tpu.dimension_semantics<arbitrary>], iteration_bounds = array<i64: 1, 1>, scalar_prefetch = 0 : i64, scratch_operands = 1 : i64, tpu.core_type = #tpu.core_type<tc>, window_params = [{transform_indices = @transform_0, window_bounds = array<i64: 384, 1>}, {pipeline_mode = #tpu.pipeline_mode<synchronous>, transform_indices = @transform_1, window_bounds = array<i64: 1, 384>}, {transform_indices = @transform_2, window_bounds = array<i64: 384, 384>}, {transform_indices = @transform_3, window_bounds = array<i64: 1, 1, 1>}]} {
    %c0_i32 = arith.constant 0 : i32
    %0 = arith.cmpi eq, %arg1, %c0_i32 : i32
    %1 = arith.extui %0 : i1 to i32
    %c0_i32_0 = arith.constant 0 : i32
    %2 = arith.cmpi ne, %1, %c0_i32_0 : i32
    scf.if %2 {
      %cst_13 = arith.constant 0.000000e+00 : f32
      %116 = vector.broadcast %cst_13 : f32 to vector<8x384xf32>
      %c0_14 = arith.constant 0 : index
      %c0_15 = arith.constant 0 : index
      %117 = vector.load %arg6[%c0_14, %c0_15] : memref<8x384xf32, #tpu.memory_space<vmem>>, vector<8x384xf32>
      tpu.vector_store %arg6[%c0_14, %c0_15], %116 {strides = array<i32>} : memref<8x384xf32, #tpu.memory_space<vmem>>, vector<8x384xf32>,
    } else {
    }
    %c0 = arith.constant 0 : index
    %c0_1 = arith.constant 0 : index
    %3 = vector.load %arg4[%c0, %c0_1] : memref<384x384xf32, #tpu.memory_space<vmem>>, vector<384x384xf32>
    %c0_2 = arith.constant 0 : index
    %c0_3 = arith.constant 0 : index
    %4 = vector.load %arg2[%c0_2, %c0_3] : memref<384x1xf32, #tpu.memory_space<vmem>>, vector<384x1xf32>
    %c0_4 = arith.constant 0 : index
    %c0_5 = arith.constant 0 : index
    %5 = vector.load %arg3[%c0_4, %c0_5] : memref<1x384xf32, #tpu.memory_space<vmem>>, vector<1x384xf32>
    %6 = vector.broadcast %4 : vector<384x1xf32> to vector<384x384xf32>
    %7 = arith.addf %3, %6 : vector<384x384xf32>
    %cst = arith.constant 0.000000e+00 : f32
    %8 = vector.broadcast %cst : f32 to vector<384x384xf32>
    %9 = arith.maximumf %7, %8 : vector<384x384xf32>
    %10 = vector.broadcast %5 : vector<1x384xf32> to vector<384x384xf32>
    %11 = arith.addf %3, %10 : vector<384x384xf32>
    %cst_6 = arith.constant 0.000000e+00 : f32
    %12 = vector.broadcast %cst_6 : f32 to vector<384x384xf32>
    %13 = arith.maximumf %11, %12 : vector<384x384xf32>
    %14 = arith.addf %9, %13 : vector<384x384xf32>
    %15 = vector.extract_strided_slice %14 {offsets = [0, 0], sizes = [8, 384], strides = [1, 1]} : vector<384x384xf32> to vector<8x384xf32>
    %16 = vector.extract_strided_slice %14 {offsets = [8, 0], sizes = [8, 384], strides = [1, 1]} : vector<384x384xf32> to vector<8x384xf32>
    %17 = arith.addf %15, %16 : vector<8x384xf32>
    %18 = vector.extract_strided_slice %14 {offsets = [16, 0], sizes = [8, 384], strides = [1, 1]} : vector<384x384xf32> to vector<8x384xf32>
    %19 = arith.addf %17, %18 : vector<8x384xf32>
    %20 = vector.extract_strided_slice %14 {offsets = [24, 0], sizes = [8, 384], strides = [1, 1]} : vector<384x384xf32> to vector<8x384xf32>
    %21 = arith.addf %19, %20 : vector<8x384xf32>
    %22 = vector.extract_strided_slice %14 {offsets = [32, 0], sizes = [8, 384], strides = [1, 1]} : vector<384x384xf32> to vector<8x384xf32>
    %23 = arith.addf %21, %22 : vector<8x384xf32>
    %24 = vector.extract_strided_slice %14 {offsets = [40, 0], sizes = [8, 384], strides = [1, 1]} : vector<384x384xf32> to vector<8x384xf32>
    %25 = arith.addf %23, %24 : vector<8x384xf32>
    %26 = vector.extract_strided_slice %14 {offsets = [48, 0], sizes = [8, 384], strides = [1, 1]} : vector<384x384xf32> to vector<8x384xf32>
    %27 = arith.addf %25, %26 : vector<8x384xf32>
    %28 = vector.extract_strided_slice %14 {offsets = [56, 0], sizes = [8, 384], strides = [1, 1]} : vector<384x384xf32> to vector<8x384xf32>
    %29 = arith.addf %27, %28 : vector<8x384xf32>
    %30 = vector.extract_strided_slice %14 {offsets = [64, 0], sizes = [8, 384], strides = [1, 1]} : vector<384x384xf32> to vector<8x384xf32>
    %31 = arith.addf %29, %30 : vector<8x384xf32>
    %32 = vector.extract_strided_slice %14 {offsets = [72, 0], sizes = [8, 384], strides = [1, 1]} : vector<384x384xf32> to vector<8x384xf32>
    %33 = arith.addf %31, %32 : vector<8x384xf32>
    %34 = vector.extract_strided_slice %14 {offsets = [80, 0], sizes = [8, 384], strides = [1, 1]} : vector<384x384xf32> to vector<8x384xf32>
    %35 = arith.addf %33, %34 : vector<8x384xf32>
    %36 = vector.extract_strided_slice %14 {offsets = [88, 0], sizes = [8, 384], strides = [1, 1]} : vector<384x384xf32> to vector<8x384xf32>
    %37 = arith.addf %35, %36 : vector<8x384xf32>
    %38 = vector.extract_strided_slice %14 {offsets = [96, 0], sizes = [8, 384], strides = [1, 1]} : vector<384x384xf32> to vector<8x384xf32>
    %39 = arith.addf %37, %38 : vector<8x384xf32>
    %40 = vector.extract_strided_slice %14 {offsets = [104, 0], sizes = [8, 384], strides = [1, 1]} : vector<384x384xf32> to vector<8x384xf32>
    %41 = arith.addf %39, %40 : vector<8x384xf32>
    %42 = vector.extract_strided_slice %14 {offsets = [112, 0], sizes = [8, 384], strides = [1, 1]} : vector<384x384xf32> to vector<8x384xf32>
    %43 = arith.addf %41, %42 : vector<8x384xf32>
    %44 = vector.extract_strided_slice %14 {offsets = [120, 0], sizes = [8, 384], strides = [1, 1]} : vector<384x384xf32> to vector<8x384xf32>
    %45 = arith.addf %43, %44 : vector<8x384xf32>
    %46 = vector.extract_strided_slice %14 {offsets = [128, 0], sizes = [8, 384], strides = [1, 1]} : vector<384x384xf32> to vector<8x384xf32>
    %47 = arith.addf %45, %46 : vector<8x384xf32>
    %48 = vector.extract_strided_slice %14 {offsets = [136, 0], sizes = [8, 384], strides = [1, 1]} : vector<384x384xf32> to vector<8x384xf32>
    %49 = arith.addf %47, %48 : vector<8x384xf32>
    %50 = vector.extract_strided_slice %14 {offsets = [144, 0], sizes = [8, 384], strides = [1, 1]} : vector<384x384xf32> to vector<8x384xf32>
    %51 = arith.addf %49, %50 : vector<8x384xf32>
    %52 = vector.extract_strided_slice %14 {offsets = [152, 0], sizes = [8, 384], strides = [1, 1]} : vector<384x384xf32> to vector<8x384xf32>
    %53 = arith.addf %51, %52 : vector<8x384xf32>
    %54 = vector.extract_strided_slice %14 {offsets = [160, 0], sizes = [8, 384], strides = [1, 1]} : vector<384x384xf32> to vector<8x384xf32>
    %55 = arith.addf %53, %54 : vector<8x384xf32>
    %56 = vector.extract_strided_slice %14 {offsets = [168, 0], sizes = [8, 384], strides = [1, 1]} : vector<384x384xf32> to vector<8x384xf32>
    %57 = arith.addf %55, %56 : vector<8x384xf32>
    %58 = vector.extract_strided_slice %14 {offsets = [176, 0], sizes = [8, 384], strides = [1, 1]} : vector<384x384xf32> to vector<8x384xf32>
    %59 = arith.addf %57, %58 : vector<8x384xf32>
    %60 = vector.extract_strided_slice %14 {offsets = [184, 0], sizes = [8, 384], strides = [1, 1]} : vector<384x384xf32> to vector<8x384xf32>
    %61 = arith.addf %59, %60 : vector<8x384xf32>
    %62 = vector.extract_strided_slice %14 {offsets = [192, 0], sizes = [8, 384], strides = [1, 1]} : vector<384x384xf32> to vector<8x384xf32>
    %63 = arith.addf %61, %62 : vector<8x384xf32>
    %64 = vector.extract_strided_slice %14 {offsets = [200, 0], sizes = [8, 384], strides = [1, 1]} : vector<384x384xf32> to vector<8x384xf32>
    %65 = arith.addf %63, %64 : vector<8x384xf32>
    %66 = vector.extract_strided_slice %14 {offsets = [208, 0], sizes = [8, 384], strides = [1, 1]} : vector<384x384xf32> to vector<8x384xf32>
    %67 = arith.addf %65, %66 : vector<8x384xf32>
    %68 = vector.extract_strided_slice %14 {offsets = [216, 0], sizes = [8, 384], strides = [1, 1]} : vector<384x384xf32> to vector<8x384xf32>
    %69 = arith.addf %67, %68 : vector<8x384xf32>
    %70 = vector.extract_strided_slice %14 {offsets = [224, 0], sizes = [8, 384], strides = [1, 1]} : vector<384x384xf32> to vector<8x384xf32>
    %71 = arith.addf %69, %70 : vector<8x384xf32>
    %72 = vector.extract_strided_slice %14 {offsets = [232, 0], sizes = [8, 384], strides = [1, 1]} : vector<384x384xf32> to vector<8x384xf32>
    %73 = arith.addf %71, %72 : vector<8x384xf32>
    %74 = vector.extract_strided_slice %14 {offsets = [240, 0], sizes = [8, 384], strides = [1, 1]} : vector<384x384xf32> to vector<8x384xf32>
    %75 = arith.addf %73, %74 : vector<8x384xf32>
    %76 = vector.extract_strided_slice %14 {offsets = [248, 0], sizes = [8, 384], strides = [1, 1]} : vector<384x384xf32> to vector<8x384xf32>
    %77 = arith.addf %75, %76 : vector<8x384xf32>
    %78 = vector.extract_strided_slice %14 {offsets = [256, 0], sizes = [8, 384], strides = [1, 1]} : vector<384x384xf32> to vector<8x384xf32>
    %79 = arith.addf %77, %78 : vector<8x384xf32>
    %80 = vector.extract_strided_slice %14 {offsets = [264, 0], sizes = [8, 384], strides = [1, 1]} : vector<384x384xf32> to vector<8x384xf32>
    %81 = arith.addf %79, %80 : vector<8x384xf32>
    %82 = vector.extract_strided_slice %14 {offsets = [272, 0], sizes = [8, 384], strides = [1, 1]} : vector<384x384xf32> to vector<8x384xf32>
    %83 = arith.addf %81, %82 : vector<8x384xf32>
    %84 = vector.extract_strided_slice %14 {offsets = [280, 0], sizes = [8, 384], strides = [1, 1]} : vector<384x384xf32> to vector<8x384xf32>
    %85 = arith.addf %83, %84 : vector<8x384xf32>
    %86 = vector.extract_strided_slice %14 {offsets = [288, 0], sizes = [8, 384], strides = [1, 1]} : vector<384x384xf32> to vector<8x384xf32>
    %87 = arith.addf %85, %86 : vector<8x384xf32>
    %88 = vector.extract_strided_slice %14 {offsets = [296, 0], sizes = [8, 384], strides = [1, 1]} : vector<384x384xf32> to vector<8x384xf32>
    %89 = arith.addf %87, %88 : vector<8x384xf32>
    %90 = vector.extract_strided_slice %14 {offsets = [304, 0], sizes = [8, 384], strides = [1, 1]} : vector<384x384xf32> to vector<8x384xf32>
    %91 = arith.addf %89, %90 : vector<8x384xf32>
    %92 = vector.extract_strided_slice %14 {offsets = [312, 0], sizes = [8, 384], strides = [1, 1]} : vector<384x384xf32> to vector<8x384xf32>
    %93 = arith.addf %91, %92 : vector<8x384xf32>
    %94 = vector.extract_strided_slice %14 {offsets = [320, 0], sizes = [8, 384], strides = [1, 1]} : vector<384x384xf32> to vector<8x384xf32>
    %95 = arith.addf %93, %94 : vector<8x384xf32>
    %96 = vector.extract_strided_slice %14 {offsets = [328, 0], sizes = [8, 384], strides = [1, 1]} : vector<384x384xf32> to vector<8x384xf32>
    %97 = arith.addf %95, %96 : vector<8x384xf32>
    %98 = vector.extract_strided_slice %14 {offsets = [336, 0], sizes = [8, 384], strides = [1, 1]} : vector<384x384xf32> to vector<8x384xf32>
    %99 = arith.addf %97, %98 : vector<8x384xf32>
    %100 = vector.extract_strided_slice %14 {offsets = [344, 0], sizes = [8, 384], strides = [1, 1]} : vector<384x384xf32> to vector<8x384xf32>
    %101 = arith.addf %99, %100 : vector<8x384xf32>
    %102 = vector.extract_strided_slice %14 {offsets = [352, 0], sizes = [8, 384], strides = [1, 1]} : vector<384x384xf32> to vector<8x384xf32>
    %103 = arith.addf %101, %102 : vector<8x384xf32>
    %104 = vector.extract_strided_slice %14 {offsets = [360, 0], sizes = [8, 384], strides = [1, 1]} : vector<384x384xf32> to vector<8x384xf32>
    %105 = arith.addf %103, %104 : vector<8x384xf32>
    %106 = vector.extract_strided_slice %14 {offsets = [368, 0], sizes = [8, 384], strides = [1, 1]} : vector<384x384xf32> to vector<8x384xf32>
    %107 = arith.addf %105, %106 : vector<8x384xf32>
    %108 = vector.extract_strided_slice %14 {offsets = [376, 0], sizes = [8, 384], strides = [1, 1]} : vector<384x384xf32> to vector<8x384xf32>
    %109 = arith.addf %107, %108 : vector<8x384xf32>
    %c0_7 = arith.constant 0 : index
    %c0_8 = arith.constant 0 : index
    %110 = vector.load %arg6[%c0_7, %c0_8] : memref<8x384xf32, #tpu.memory_space<vmem>>, vector<8x384xf32>
    %111 = arith.addf %110, %109 : vector<8x384xf32>
    %c0_9 = arith.constant 0 : index
    %c0_10 = arith.constant 0 : index
    %112 = vector.load %arg6[%c0_9, %c0_10] : memref<8x384xf32, #tpu.memory_space<vmem>>, vector<8x384xf32>
    tpu.vector_store %arg6[%c0_9, %c0_10], %111 {strides = array<i32>} : memref<8x384xf32, #tpu.memory_space<vmem>>, vector<8x384xf32>,
    %c0_i32_11 = arith.constant 0 : i32
    %113 = arith.cmpi eq, %arg1, %c0_i32_11 : i32
    %114 = arith.extui %113 : i1 to i32
    %c0_i32_12 = arith.constant 0 : i32
    %115 = arith.cmpi ne, %114, %c0_i32_12 : i32
    scf.if %115 {
      %c0_13 = arith.constant 0 : index
      %c0_14 = arith.constant 0 : index
      %116 = vector.load %arg6[%c0_13, %c0_14] : memref<8x384xf32, #tpu.memory_space<vmem>>, vector<8x384xf32>
      %cst_15 = arith.constant dense<0.000000e+00> : vector<8xf32>
      %117 = vector.multi_reduction <add>, %116, %cst_15 [1] : vector<8x384xf32> to vector<8xf32>
      %118 = vector.shape_cast %117 : vector<8xf32> to vector<8x1xf32>
      %cst_16 = arith.constant dense<0.000000e+00> : vector<1xf32>
      %119 = vector.multi_reduction <add>, %118, %cst_16 [0] : vector<8x1xf32> to vector<1xf32>
      %120 = vector.shape_cast %119 : vector<1xf32> to vector<1x1xf32>
      %121 = vector.shape_cast %120 : vector<1x1xf32> to vector<1x1x1xf32>
      %c0_17 = arith.constant 0 : index
      %c0_18 = arith.constant 0 : index
      %c0_19 = arith.constant 0 : index
      %122 = vector.load %arg5[%c0_17, %c0_18, %c0_19] : memref<1x1x1xf32, #tpu.memory_space<vmem>>, vector<1x1x1xf32>
      tpu.vector_store %arg5[%c0_17, %c0_18, %c0_19], %121 {strides = array<i32>} : memref<1x1x1xf32, #tpu.memory_space<vmem>>, vector<1x1x1xf32>,
    } else {
    }
    return
  }
  func.func @transform_0(%arg0: i32, %arg1: i32) -> (i32, i32) {
    %c1_i32 = arith.constant 1 : i32
    %0 = arith.muli %arg0, %c1_i32 : i32
    %1 = arith.addi %0, %arg1 : i32
    %c0_i32 = arith.constant 0 : i32
    %c0_i32_0 = arith.constant 0 : i32
    return %1, %c0_i32 : i32, i32
  }
  func.func @transform_1(%arg0: i32, %arg1: i32) -> (i32, i32) {
    %c0_i32 = arith.constant 0 : i32
    %c0_i32_0 = arith.constant 0 : i32
    %c0_i32_1 = arith.constant 0 : i32
    return %c0_i32, %c0_i32_0 : i32, i32
  }
  func.func @transform_2(%arg0: i32, %arg1: i32) -> (i32, i32) {
    %c1_i32 = arith.constant 1 : i32
    %0 = arith.muli %arg0, %c1_i32 : i32
    %1 = arith.addi %0, %arg1 : i32
    %c0_i32 = arith.constant 0 : i32
    %c0_i32_0 = arith.constant 0 : i32
    return %1, %c0_i32 : i32, i32
  }
  func.func @transform_3(%arg0: i32, %arg1: i32) -> (i32, i32, i32) {
    %c0_i32 = arith.constant 0 : i32
    %c0_i32_0 = arith.constant 0 : i32
    %c0_i32_1 = arith.constant 0 : i32
    return %arg0, %c0_i32, %c0_i32_0 : i32, i32, i32
  }
}

</mosaic_0001>

<llo_original>
// kernel: tpu_custom_call.1
$region0: #{tpu_custom_call.1}
  #allocation0 [shape = 'u32[]', space=smem, size = 0x4, offset = 0x4, fixed_abs, tag = 'smem constant byte address 0x4 - core index']
  #allocation1 [shape = 'u32[144,128]{1,0:T(1,128)}', space=vmem, size = 0x12000, scoped, tag = 'internal scratch']
  #allocation2 [shape = 'f32[8,384]{1,0:T(8,128)}', space=vmem, size = 0x3000, scoped, tag = 'scratch operand']
  %s0 = inlined_call_operand.vmem [shape: f32[384,1], index: 0, kind: input, shape index: {}]
  %s1 = inlined_call_operand.vmem [shape: f32[1,384], index: 1, kind: input, shape index: {}]
  %s2 = inlined_call_operand.hbm [shape: f32[384,384], index: 2, kind: input, shape index: {}]
  %s3 = inlined_call_operand.hbm [shape: f32[1,1,1], index: 3, kind: output, shape index: {}]
  %s4 = sld [smem:[#allocation0]]
  $region34: #{tpu_custom_call.1} parent=0
    _
  %s6 = ssub.s32 1, %s4
  %s7 = scalar_select 0, %s6, %s4
  $region1: #{tpu_custom_call.1} parent=0
    #allocation3 [shape = 'u8[589824]{0}', space=vmem, size = 0x90000, scoped, tag = 'input window, operand 2, single buffered']
    #allocation4 [shape = 's32[1]{0}', space=sflag, size = 0x4, scoped, tag = 'scoped memory for tpu_custom_call.1']
    #allocation5 [shape = 's32[1]{0}', space=sflag, size = 0x4, scoped, tag = 'scoped memory for tpu_custom_call.1']
    #allocation6 [shape = 'u8[512]{0}', space=vmem, size = 0x400, scoped, tag = 'output window, operand 0, single buffered']
    %8 = vsyncpa [#allocation4], 0
    %9 = vsyncpa [#allocation5], 0
    // Predicated region
    $region2: #{tpu_custom_call.1} parent=1 // pred_check
      _
    $region3: #{tpu_custom_call.1} parent=1 // pred_check_branch
      %11 = sbr.rel (0) target = $region5
    $region4: #{tpu_custom_call.1} parent=1 // pred_region
      %s12 = sadd.s32 0, 0
      %s13 = smul.u32 48, %s12
      %p14 = scmp.lt.s32.totalorder %s13, 47
      %s15 = scalar_select %p14, %s13, 47
      %s16 = smul.addr %s15, 8
      %s17 = scalar_lea.vmem %s0, %s16
      %s18 = sadd.s32 0, 0
      %s19 = smul.u32 48, %s18
    $region5: #{tpu_custom_call.1} parent=1 // pred_fallthru
      _
    // Predicated region
    $region6: #{tpu_custom_call.1} parent=1 // pred_check
      _
    $region7: #{tpu_custom_call.1} parent=1 // pred_check_branch
      %21 = sbr.rel (0) target = $region9
    $region8: #{tpu_custom_call.1} parent=1 // pred_region
      _
    $region9: #{tpu_custom_call.1} parent=1 // pred_fallthru
      _
    // Predicated region
    $region10: #{tpu_custom_call.1} parent=1 // pred_check
      _
    $region11: #{tpu_custom_call.1} parent=1 // pred_check_branch
      %23 = sbr.rel (0) target = $region13
    $region12: #{tpu_custom_call.1} parent=1 // pred_region
      %s24 = sadd.s32 0, 0
      %s25 = smul.u32 48, %s24
      %s27 = ssub.s32 18432, 18432
      %28 = vsyncadd [#allocation4], %s27
      %s29 = smul.addr %s25, 3
      %s30 = smul.addr %s29, 128
      %s31 = scalar_lea.hbm %s2, %s30
      %s32 = sshll.u32 [#allocation3], 4
      %s33 = int_to_ptr.vmem [resolvable:$true] %s32
      %38 = dma.hbm_to_vmem [thread:$0]  %s31, 18432, %s33, [#allocation4], 384, 384, 24
    $region13: #{tpu_custom_call.1} parent=1 // pred_fallthru
      _
    // Predicated region
    $region14: #{tpu_custom_call.1} parent=1 // pred_check
      _
    $region15: #{tpu_custom_call.1} parent=1 // pred_check_branch
      %40 = sbr.rel (0) target = $region17
    $region16: #{tpu_custom_call.1} parent=1 // pred_region
      %41 = dma.done [#allocation4], 18432
    $region17: #{tpu_custom_call.1} parent=1 // pred_fallthru
      _
    %s42 = sadd.s32 0, 0
    %s43 = smul.u32 48, %s42
    %p44 = scmp.lt.s32.totalorder %s43, 47
    %s45 = scalar_select %p44, %s43, 47
    %s46 = smul.addr %s45, 8
    %s47 = scalar_lea.vmem %s0, %s46
    %s48 = sadd.s32 0, 0
    %s49 = smul.u32 48, %s48
    %p50 = scmp.lt.s32.totalorder %s49, 47
    %s51 = scalar_select %p50, %s49, 47
    %s52 = smul.addr %s51, 8
    %s53 = scalar_lea.vmem %s0, %s52
    %s54 = sadd.s32 0, 0
    %s55 = smul.u32 48, %s54
    %s56 = sadd.s32 0, 0
    %s57 = smul.u32 48, %s56
    %p58 = scmp.eq.s32.totalorder 0, 0
    // Predicated region
    $region18: #{tpu_custom_call.1} parent=1 // pred_check
      %p59 = pneg %p58
    $region19: #{tpu_custom_call.1} parent=1 // pred_check_branch
      %61 = sbr.rel (%p59) target = $region21
    $region20: #{tpu_custom_call.1} parent=1 // pred_region
      %62 = vst [vmem:[#allocation2] sm:$0xff] 0.0
      %63 = vst [vmem:[#allocation2 + $0x8] sm:$0xff] 0.0
      %64 = vst [vmem:[#allocation2 + $0x10] sm:$0xff] 0.0
    $region21: #{tpu_custom_call.1} parent=1 // pred_fallthru
      _
    %v65 = vld [vmem:[#allocation3] sm:$0xff]
    %v66 = vld [vmem:[#allocation3 + $0x8] sm:$0xff]
    %v67 = vld [vmem:[#allocation3 + $0x10] sm:$0xff]
    %v68 = vld [vmem:[#allocation3 + $0x18] sm:$0xff]
    %v69 = vld [vmem:[#allocation3 + $0x20] sm:$0xff]
    %v70 = vld [vmem:[#allocation3 + $0x28] sm:$0xff]
    %v71 = vld [vmem:[#allocation3 + $0x30] sm:$0xff]
    %v72 = vld [vmem:[#allocation3 + $0x38] sm:$0xff]
    %v73 = vld [vmem:[#allocation3 + $0x40] sm:$0xff]
    %v74 = vld [vmem:[#allocation3 + $0x48] sm:$0xff]
    %v75 = vld [vmem:[#allocation3 + $0x50] sm:$0xff]
    %v76 = vld [vmem:[#allocation3 + $0x58] sm:$0xff]
    %v77 = vld [vmem:[#allocation3 + $0x60] sm:$0xff]
    %v78 = vld [vmem:[#allocation3 + $0x68] sm:$0xff]
    %v79 = vld [vmem:[#allocation3 + $0x70] sm:$0xff]
    %v80 = vld [vmem:[#allocation3 + $0x78] sm:$0xff]
    %v81 = vld [vmem:[#allocation3 + $0x80] sm:$0xff]
    %v82 = vld [vmem:[#allocation3 + $0x88] sm:$0xff]
    %v83 = vld [vmem:[#allocation3 + $0x90] sm:$0xff]
    %v84 = vld [vmem:[#allocation3 + $0x98] sm:$0xff]
    %v85 = vld [vmem:[#allocation3 + $0xa0] sm:$0xff]
    %v86 = vld [vmem:[#allocation3 + $0xa8] sm:$0xff]
    %v87 = vld [vmem:[#allocation3 + $0xb0] sm:$0xff]
    %v88 = vld [vmem:[#allocation3 + $0xb8] sm:$0xff]
    %v89 = vld [vmem:[#allocation3 + $0xc0] sm:$0xff]
    %v90 = vld [vmem:[#allocation3 + $0xc8] sm:$0xff]
    %v91 = vld [vmem:[#allocation3 + $0xd0] sm:$0xff]
    %v92 = vld [vmem:[#allocation3 + $0xd8] sm:$0xff]
    %v93 = vld [vmem:[#allocation3 + $0xe0] sm:$0xff]
    %v94 = vld [vmem:[#allocation3 + $0xe8] sm:$0xff]
    %v95 = vld [vmem:[#allocation3 + $0xf0] sm:$0xff]
    %v96 = vld [vmem:[#allocation3 + $0xf8] sm:$0xff]
    %v97 = vld [vmem:[#allocation3 + $0x100] sm:$0xff]
    %v98 = vld [vmem:[#allocation3 + $0x108] sm:$0xff]
    %v99 = vld [vmem:[#allocation3 + $0x110] sm:$0xff]
    %v100 = vld [vmem:[#allocation3 + $0x118] sm:$0xff]
    %v101 = vld [vmem:[#allocation3 + $0x120] sm:$0xff]
    %v102 = vld [vmem:[#allocation3 + $0x128] sm:$0xff]
    %v103 = vld [vmem:[#allocation3 + $0x130] sm:$0xff]
    %v104 = vld [vmem:[#allocation3 + $0x138] sm:$0xff]
    %v105 = vld [vmem:[#allocation3 + $0x140] sm:$0xff]
    %v106 = vld [vmem:[#allocation3 + $0x148] sm:$0xff]
    %v107 = vld [vmem:[#allocation3 + $0x150] sm:$0xff]
    %v108 = vld [vmem:[#allocation3 + $0x158] sm:$0xff]
    %v109 = vld [vmem:[#allocation3 + $0x160] sm:$0xff]
    %v110 = vld [vmem:[#allocation3 + $0x168] sm:$0xff]
    %v111 = vld [vmem:[#allocation3 + $0x170] sm:$0xff]
    %v112 = vld [vmem:[#allocation3 + $0x178] sm:$0xff]
    %v113 = vld [vmem:[#allocation3 + $0x180] sm:$0xff]
    %v114 = vld [vmem:[#allocation3 + $0x188] sm:$0xff]
    %v115 = vld [vmem:[#allocation3 + $0x190] sm:$0xff]
    %v116 = vld [vmem:[#allocation3 + $0x198] sm:$0xff]
    %v117 = vld [vmem:[#allocation3 + $0x1a0] sm:$0xff]
    %v118 = vld [vmem:[#allocation3 + $0x1a8] sm:$0xff]
    %v119 = vld [vmem:[#allocation3 + $0x1b0] sm:$0xff]
    %v120 = vld [vmem:[#allocation3 + $0x1b8] sm:$0xff]
    %v121 = vld [vmem:[#allocation3 + $0x1c0] sm:$0xff]
    %v122 = vld [vmem:[#allocation3 + $0x1c8] sm:$0xff]
    %v123 = vld [vmem:[#allocation3 + $0x1d0] sm:$0xff]
    %v124 = vld [vmem:[#allocation3 + $0x1d8] sm:$0xff]
    %v125 = vld [vmem:[#allocation3 + $0x1e0] sm:$0xff]
    %v126 = vld [vmem:[#allocation3 + $0x1e8] sm:$0xff]
    %v127 = vld [vmem:[#allocation3 + $0x1f0] sm:$0xff]
    %v128 = vld [vmem:[#allocation3 + $0x1f8] sm:$0xff]
    %v129 = vld [vmem:[#allocation3 + $0x200] sm:$0xff]
    %v130 = vld [vmem:[#allocation3 + $0x208] sm:$0xff]
    %v131 = vld [vmem:[#allocation3 + $0x210] sm:$0xff]
    %v132 = vld [vmem:[#allocation3 + $0x218] sm:$0xff]
    %v133 = vld [vmem:[#allocation3 + $0x220] sm:$0xff]
    %v134 = vld [vmem:[#allocation3 + $0x228] sm:$0xff]
    %v135 = vld [vmem:[#allocation3 + $0x230] sm:$0xff]
    %v136 = vld [vmem:[#allocation3 + $0x238] sm:$0xff]
    %v137 = vld [vmem:[#allocation3 + $0x240] sm:$0xff]
    %v138 = vld [vmem:[#allocation3 + $0x248] sm:$0xff]
    %v139 = vld [vmem:[#allocation3 + $0x250] sm:$0xff]
    %v140 = vld [vmem:[#allocation3 + $0x258] sm:$0xff]
    %v141 = vld [vmem:[#allocation3 + $0x260] sm:$0xff]
    %v142 = vld [vmem:[#allocation3 + $0x268] sm:$0xff]
    %v143 = vld [vmem:[#allocation3 + $0x270] sm:$0xff]
    %v144 = vld [vmem:[#allocation3 + $0x278] sm:$0xff]
    %v145 = vld [vmem:[#allocation3 + $0x280] sm:$0xff]
    %v146 = vld [vmem:[#allocation3 + $0x288] sm:$0xff]
    %v147 = vld [vmem:[#allocation3 + $0x290] sm:$0xff]
    %v148 = vld [vmem:[#allocation3 + $0x298] sm:$0xff]
    %v149 = vld [vmem:[#allocation3 + $0x2a0] sm:$0xff]
    %v150 = vld [vmem:[#allocation3 + $0x2a8] sm:$0xff]
    %v151 = vld [vmem:[#allocation3 + $0x2b0] sm:$0xff]
    %v152 = vld [vmem:[#allocation3 + $0x2b8] sm:$0xff]
    %v153 = vld [vmem:[#allocation3 + $0x2c0] sm:$0xff]
    %v154 = vld [vmem:[#allocation3 + $0x2c8] sm:$0xff]
    %v155 = vld [vmem:[#allocation3 + $0x2d0] sm:$0xff]
    %v156 = vld [vmem:[#allocation3 + $0x2d8] sm:$0xff]
    %v157 = vld [vmem:[#allocation3 + $0x2e0] sm:$0xff]
    %v158 = vld [vmem:[#allocation3 + $0x2e8] sm:$0xff]
    %v159 = vld [vmem:[#allocation3 + $0x2f0] sm:$0xff]
    %v160 = vld [vmem:[#allocation3 + $0x2f8] sm:$0xff]
    %v161 = vld [vmem:[#allocation3 + $0x300] sm:$0xff]
    %v162 = vld [vmem:[#allocation3 + $0x308] sm:$0xff]
    %v163 = vld [vmem:[#allocation3 + $0x310] sm:$0xff]
    %v164 = vld [vmem:[#allocation3 + $0x318] sm:$0xff]
    %v165 = vld [vmem:[#allocation3 + $0x320] sm:$0xff]
    %v166 = vld [vmem:[#allocation3 + $0x328] sm:$0xff]
    %v167 = vld [vmem:[#allocation3 + $0x330] sm:$0xff]
    %v168 = vld [vmem:[#allocation3 + $0x338] sm:$0xff]
    %v169 = vld [vmem:[#allocation3 + $0x340] sm:$0xff]
    %v170 = vld [vmem:[#allocation3 + $0x348] sm:$0xff]
    %v171 = vld [vmem:[#allocation3 + $0x350] sm:$0xff]
    %v172 = vld [vmem:[#allocation3 + $0x358] sm:$0xff]
    %v173 = vld [vmem:[#allocation3 + $0x360] sm:$0xff]
    %v174 = vld [vmem:[#allocation3 + $0x368] sm:$0xff]
    %v175 = vld [vmem:[#allocation3 + $0x370] sm:$0xff]
    %v176 = vld [vmem:[#allocation3 + $0x378] sm:$0xff]
    %v177 = vld [vmem:[#allocation3 + $0x380] sm:$0xff]
    %v178 = vld [vmem:[#allocation3 + $0x388] sm:$0xff]
    %v179 = vld [vmem:[#allocation3 + $0x390] sm:$0xff]
    %v180 = vld [vmem:[#allocation3 + $0x398] sm:$0xff]
    %v181 = vld [vmem:[#allocation3 + $0x3a0] sm:$0xff]
    %v182 = vld [vmem:[#allocation3 + $0x3a8] sm:$0xff]
    %v183 = vld [vmem:[#allocation3 + $0x3b0] sm:$0xff]
    %v184 = vld [vmem:[#allocation3 + $0x3b8] sm:$0xff]
    %v185 = vld [vmem:[#allocation3 + $0x3c0] sm:$0xff]
    %v186 = vld [vmem:[#allocation3 + $0x3c8] sm:$0xff]
    %v187 = vld [vmem:[#allocation3 + $0x3d0] sm:$0xff]
    %v188 = vld [vmem:[#allocation3 + $0x3d8] sm:$0xff]
    %v189 = vld [vmem:[#allocation3 + $0x3e0] sm:$0xff]
    %v190 = vld [vmem:[#allocation3 + $0x3e8] sm:$0xff]
    %v191 = vld [vmem:[#allocation3 + $0x3f0] sm:$0xff]
    %v192 = vld [vmem:[#allocation3 + $0x3f8] sm:$0xff]
    %v193 = vld [vmem:[#allocation3 + $0x400] sm:$0xff]
    %v194 = vld [vmem:[#allocation3 + $0x408] sm:$0xff]
    %v195 = vld [vmem:[#allocation3 + $0x410] sm:$0xff]
    %v196 = vld [vmem:[#allocation3 + $0x418] sm:$0xff]
    %v197 = vld [vmem:[#allocation3 + $0x420] sm:$0xff]
    %v198 = vld [vmem:[#allocation3 + $0x428] sm:$0xff]
    %v199 = vld [vmem:[#allocation3 + $0x430] sm:$0xff]
    %v200 = vld [vmem:[#allocation3 + $0x438] sm:$0xff]
    %v201 = vld [vmem:[#allocation3 + $0x440] sm:$0xff]
    %v202 = vld [vmem:[#allocation3 + $0x448] sm:$0xff]
    %v203 = vld [vmem:[#allocation3 + $0x450] sm:$0xff]
    %v204 = vld [vmem:[#allocation3 + $0x458] sm:$0xff]
    %v205 = vld [vmem:[#allocation3 + $0x460] sm:$0xff]
    %v206 = vld [vmem:[#allocation3 + $0x468] sm:$0xff]
    %v207 = vld [vmem:[#allocation3 + $0x470] sm:$0xff]
    %v208 = vld [vmem:[#allocation3 + $0x478] sm:$0xff]
    %v209 = vld [vmem:[%s53] sm:$0xff]
    %v210 = vld [vmem:[%s53 + $0x8] sm:$0xff]
    %v211 = vld [vmem:[%s53 + $0x10] sm:$0xff]
    %v212 = vld [vmem:[%s53 + $0x18] sm:$0xff]
    %v213 = vld [vmem:[%s53 + $0x20] sm:$0xff]
    %v214 = vld [vmem:[%s53 + $0x28] sm:$0xff]
    %v215 = vld [vmem:[%s53 + $0x30] sm:$0xff]
    %v216 = vld [vmem:[%s53 + $0x38] sm:$0xff]
    %v217 = vld [vmem:[%s53 + $0x40] sm:$0xff]
    %v218 = vld [vmem:[%s53 + $0x48] sm:$0xff]
    %v219 = vld [vmem:[%s53 + $0x50] sm:$0xff]
    %v220 = vld [vmem:[%s53 + $0x58] sm:$0xff]
    %v221 = vld [vmem:[%s53 + $0x60] sm:$0xff]
    %v222 = vld [vmem:[%s53 + $0x68] sm:$0xff]
    %v223 = vld [vmem:[%s53 + $0x70] sm:$0xff]
    %v224 = vld [vmem:[%s53 + $0x78] sm:$0xff]
    %v225 = vld [vmem:[%s53 + $0x80] sm:$0xff]
    %v226 = vld [vmem:[%s53 + $0x88] sm:$0xff]
    %v227 = vld [vmem:[%s53 + $0x90] sm:$0xff]
    %v228 = vld [vmem:[%s53 + $0x98] sm:$0xff]
    %v229 = vld [vmem:[%s53 + $0xa0] sm:$0xff]
    %v230 = vld [vmem:[%s53 + $0xa8] sm:$0xff]
    %v231 = vld [vmem:[%s53 + $0xb0] sm:$0xff]
    %v232 = vld [vmem:[%s53 + $0xb8] sm:$0xff]
    %v233 = vld [vmem:[%s53 + $0xc0] sm:$0xff]
    %v234 = vld [vmem:[%s53 + $0xc8] sm:$0xff]
    %v235 = vld [vmem:[%s53 + $0xd0] sm:$0xff]
    %v236 = vld [vmem:[%s53 + $0xd8] sm:$0xff]
    %v237 = vld [vmem:[%s53 + $0xe0] sm:$0xff]
    %v238 = vld [vmem:[%s53 + $0xe8] sm:$0xff]
    %v239 = vld [vmem:[%s53 + $0xf0] sm:$0xff]
    %v240 = vld [vmem:[%s53 + $0xf8] sm:$0xff]
    %v241 = vld [vmem:[%s53 + $0x100] sm:$0xff]
    %v242 = vld [vmem:[%s53 + $0x108] sm:$0xff]
    %v243 = vld [vmem:[%s53 + $0x110] sm:$0xff]
    %v244 = vld [vmem:[%s53 + $0x118] sm:$0xff]
    %v245 = vld [vmem:[%s53 + $0x120] sm:$0xff]
    %v246 = vld [vmem:[%s53 + $0x128] sm:$0xff]
    %v247 = vld [vmem:[%s53 + $0x130] sm:$0xff]
    %v248 = vld [vmem:[%s53 + $0x138] sm:$0xff]
    %v249 = vld [vmem:[%s53 + $0x140] sm:$0xff]
    %v250 = vld [vmem:[%s53 + $0x148] sm:$0xff]
    %v251 = vld [vmem:[%s53 + $0x150] sm:$0xff]
    %v252 = vld [vmem:[%s53 + $0x158] sm:$0xff]
    %v253 = vld [vmem:[%s53 + $0x160] sm:$0xff]
    %v254 = vld [vmem:[%s53 + $0x168] sm:$0xff]
    %v255 = vld [vmem:[%s53 + $0x170] sm:$0xff]
    %v256 = vld [vmem:[%s53 + $0x178] sm:$0xff]
    %v257 = vld [vmem:[%s1] sm:$0x7]
    %259 = vset.pattern.permute.xlu0 0
    %260 = vperm.xlu0 %259, %v209
    %v261 = vpop.permute.xlu0 %260
    %264 = vset.pattern.permute.xlu0 0
    %265 = vperm.xlu0 %264, %v210
    %v266 = vpop.permute.xlu0 %265
    %269 = vset.pattern.permute.xlu0 0
    %270 = vperm.xlu0 %269, %v211
    %v271 = vpop.permute.xlu0 %270
    %274 = vset.pattern.permute.xlu0 0
    %275 = vperm.xlu0 %274, %v212
    %v276 = vpop.permute.xlu0 %275
    %279 = vset.pattern.permute.xlu0 0
    %280 = vperm.xlu0 %279, %v213
    %v281 = vpop.permute.xlu0 %280
    %284 = vset.pattern.permute.xlu0 0
    %285 = vperm.xlu0 %284, %v214
    %v286 = vpop.permute.xlu0 %285
    %289 = vset.pattern.permute.xlu0 0
    %290 = vperm.xlu0 %289, %v215
    %v291 = vpop.permute.xlu0 %290
    %294 = vset.pattern.permute.xlu0 0
    %295 = vperm.xlu0 %294, %v216
    %v296 = vpop.permute.xlu0 %295
    %299 = vset.pattern.permute.xlu0 0
    %300 = vperm.xlu0 %299, %v217
    %v301 = vpop.permute.xlu0 %300
    %304 = vset.pattern.permute.xlu0 0
    %305 = vperm.xlu0 %304, %v218
    %v306 = vpop.permute.xlu0 %305
    %309 = vset.pattern.permute.xlu0 0
    %310 = vperm.xlu0 %309, %v219
    %v311 = vpop.permute.xlu0 %310
    %314 = vset.pattern.permute.xlu0 0
    %315 = vperm.xlu0 %314, %v220
    %v316 = vpop.permute.xlu0 %315
    %319 = vset.pattern.permute.xlu0 0
    %320 = vperm.xlu0 %319, %v221
    %v321 = vpop.permute.xlu0 %320
    %324 = vset.pattern.permute.xlu0 0
    %325 = vperm.xlu0 %324, %v222
    %v326 = vpop.permute.xlu0 %325
    %329 = vset.pattern.permute.xlu0 0
    %330 = vperm.xlu0 %329, %v223
    %v331 = vpop.permute.xlu0 %330
    %334 = vset.pattern.permute.xlu0 0
    %335 = vperm.xlu0 %334, %v224
    %v336 = vpop.permute.xlu0 %335
    %339 = vset.pattern.permute.xlu0 0
    %340 = vperm.xlu0 %339, %v225
    %v341 = vpop.permute.xlu0 %340
    %344 = vset.pattern.permute.xlu0 0
    %345 = vperm.xlu0 %344, %v226
    %v346 = vpop.permute.xlu0 %345
    %349 = vset.pattern.permute.xlu0 0
    %350 = vperm.xlu0 %349, %v227
    %v351 = vpop.permute.xlu0 %350
    %354 = vset.pattern.permute.xlu0 0
    %355 = vperm.xlu0 %354, %v228
    %v356 = vpop.permute.xlu0 %355
    %359 = vset.pattern.permute.xlu0 0
    %360 = vperm.xlu0 %359, %v229
    %v361 = vpop.permute.xlu0 %360
    %364 = vset.pattern.permute.xlu0 0
    %365 = vperm.xlu0 %364, %v230
    %v366 = vpop.permute.xlu0 %365
    %369 = vset.pattern.permute.xlu0 0
    %370 = vperm.xlu0 %369, %v231
    %v371 = vpop.permute.xlu0 %370
    %374 = vset.pattern.permute.xlu0 0
    %375 = vperm.xlu0 %374, %v232
    %v376 = vpop.permute.xlu0 %375
    %379 = vset.pattern.permute.xlu0 0
    %380 = vperm.xlu0 %379, %v233
    %v381 = vpop.permute.xlu0 %380
    %384 = vset.pattern.permute.xlu0 0
    %385 = vperm.xlu0 %384, %v234
    %v386 = vpop.permute.xlu0 %385
    %389 = vset.pattern.permute.xlu0 0
    %390 = vperm.xlu0 %389, %v235
    %v391 = vpop.permute.xlu0 %390
    %394 = vset.pattern.permute.xlu0 0
    %395 = vperm.xlu0 %394, %v236
    %v396 = vpop.permute.xlu0 %395
    %399 = vset.pattern.permute.xlu0 0
    %400 = vperm.xlu0 %399, %v237
    %v401 = vpop.permute.xlu0 %400
    %404 = vset.pattern.permute.xlu0 0
    %405 = vperm.xlu0 %404, %v238
    %v406 = vpop.permute.xlu0 %405
    %409 = vset.pattern.permute.xlu0 0
    %410 = vperm.xlu0 %409, %v239
    %v411 = vpop.permute.xlu0 %410
    %414 = vset.pattern.permute.xlu0 0
    %415 = vperm.xlu0 %414, %v240
    %v416 = vpop.permute.xlu0 %415
    %419 = vset.pattern.permute.xlu0 0
    %420 = vperm.xlu0 %419, %v241
    %v421 = vpop.permute.xlu0 %420
    %424 = vset.pattern.permute.xlu0 0
    %425 = vperm.xlu0 %424, %v242
    %v426 = vpop.permute.xlu0 %425
    %429 = vset.pattern.permute.xlu0 0
    %430 = vperm.xlu0 %429, %v243
    %v431 = vpop.permute.xlu0 %430
    %434 = vset.pattern.permute.xlu0 0
    %435 = vperm.xlu0 %434, %v244
    %v436 = vpop.permute.xlu0 %435
    %439 = vset.pattern.permute.xlu0 0
    %440 = vperm.xlu0 %439, %v245
    %v441 = vpop.permute.xlu0 %440
    %444 = vset.pattern.permute.xlu0 0
    %445 = vperm.xlu0 %444, %v246
    %v446 = vpop.permute.xlu0 %445
    %449 = vset.pattern.permute.xlu0 0
    %450 = vperm.xlu0 %449, %v247
    %v451 = vpop.permute.xlu0 %450
    %454 = vset.pattern.permute.xlu0 0
    %455 = vperm.xlu0 %454, %v248
    %v456 = vpop.permute.xlu0 %455
    %459 = vset.pattern.permute.xlu0 0
    %460 = vperm.xlu0 %459, %v249
    %v461 = vpop.permute.xlu0 %460
    %464 = vset.pattern.permute.xlu0 0
    %465 = vperm.xlu0 %464, %v250
    %v466 = vpop.permute.xlu0 %465
    %469 = vset.pattern.permute.xlu0 0
    %470 = vperm.xlu0 %469, %v251
    %v471 = vpop.permute.xlu0 %470
    %474 = vset.pattern.permute.xlu0 0
    %475 = vperm.xlu0 %474, %v252
    %v476 = vpop.permute.xlu0 %475
    %479 = vset.pattern.permute.xlu0 0
    %480 = vperm.xlu0 %479, %v253
    %v481 = vpop.permute.xlu0 %480
    %484 = vset.pattern.permute.xlu0 0
    %485 = vperm.xlu0 %484, %v254
    %v486 = vpop.permute.xlu0 %485
    %489 = vset.pattern.permute.xlu0 0
    %490 = vperm.xlu0 %489, %v255
    %v491 = vpop.permute.xlu0 %490
    %494 = vset.pattern.permute.xlu0 0
    %495 = vperm.xlu0 %494, %v256
    %v496 = vpop.permute.xlu0 %495
    %v498 = vadd.f32 %v65, %v261
    %v499 = vadd.f32 %v66, %v261
    %v500 = vadd.f32 %v67, %v261
    %v501 = vadd.f32 %v68, %v266
    %v502 = vadd.f32 %v69, %v266
    %v503 = vadd.f32 %v70, %v266
    %v504 = vadd.f32 %v71, %v271
    %v505 = vadd.f32 %v72, %v271
    %v506 = vadd.f32 %v73, %v271
    %v507 = vadd.f32 %v74, %v276
    %v508 = vadd.f32 %v75, %v276
    %v509 = vadd.f32 %v76, %v276
    %v510 = vadd.f32 %v77, %v281
    %v511 = vadd.f32 %v78, %v281
    %v512 = vadd.f32 %v79, %v281
    %v513 = vadd.f32 %v80, %v286
    %v514 = vadd.f32 %v81, %v286
    %v515 = vadd.f32 %v82, %v286
    %v516 = vadd.f32 %v83, %v291
    %v517 = vadd.f32 %v84, %v291
    %v518 = vadd.f32 %v85, %v291
    %v519 = vadd.f32 %v86, %v296
    %v520 = vadd.f32 %v87, %v296
    %v521 = vadd.f32 %v88, %v296
    %v522 = vadd.f32 %v89, %v301
    %v523 = vadd.f32 %v90, %v301
    %v524 = vadd.f32 %v91, %v301
    %v525 = vadd.f32 %v92, %v306
    %v526 = vadd.f32 %v93, %v306
    %v527 = vadd.f32 %v94, %v306
    %v528 = vadd.f32 %v95, %v311
    %v529 = vadd.f32 %v96, %v311
    %v530 = vadd.f32 %v97, %v311
    %v531 = vadd.f32 %v98, %v316
    %v532 = vadd.f32 %v99, %v316
    %v533 = vadd.f32 %v100, %v316
    %v534 = vadd.f32 %v101, %v321
    %v535 = vadd.f32 %v102, %v321
    %v536 = vadd.f32 %v103, %v321
    %v537 = vadd.f32 %v104, %v326
    %v538 = vadd.f32 %v105, %v326
    %v539 = vadd.f32 %v106, %v326
    %v540 = vadd.f32 %v107, %v331
    %v541 = vadd.f32 %v108, %v331
    %v542 = vadd.f32 %v109, %v331
    %v543 = vadd.f32 %v110, %v336
    %v544 = vadd.f32 %v111, %v336
    %v545 = vadd.f32 %v112, %v336
    %v546 = vadd.f32 %v113, %v341
    %v547 = vadd.f32 %v114, %v341
    %v548 = vadd.f32 %v115, %v341
    %v549 = vadd.f32 %v116, %v346
    %v550 = vadd.f32 %v117, %v346
    %v551 = vadd.f32 %v118, %v346
    %v552 = vadd.f32 %v119, %v351
    %v553 = vadd.f32 %v120, %v351
    %v554 = vadd.f32 %v121, %v351
    %v555 = vadd.f32 %v122, %v356
    %v556 = vadd.f32 %v123, %v356
    %v557 = vadd.f32 %v124, %v356
    %v558 = vadd.f32 %v125, %v361
    %v559 = vadd.f32 %v126, %v361
    %v560 = vadd.f32 %v127, %v361
    %v561 = vadd.f32 %v128, %v366
    %v562 = vadd.f32 %v129, %v366
    %v563 = vadd.f32 %v130, %v366
    %v564 = vadd.f32 %v131, %v371
    %v565 = vadd.f32 %v132, %v371
    %v566 = vadd.f32 %v133, %v371
    %v567 = vadd.f32 %v134, %v376
    %v568 = vadd.f32 %v135, %v376
    %v569 = vadd.f32 %v136, %v376
    %v570 = vadd.f32 %v137, %v381
    %v571 = vadd.f32 %v138, %v381
    %v572 = vadd.f32 %v139, %v381
    %v573 = vadd.f32 %v140, %v386
    %v574 = vadd.f32 %v141, %v386
    %v575 = vadd.f32 %v142, %v386
    %v576 = vadd.f32 %v143, %v391
    %v577 = vadd.f32 %v144, %v391
    %v578 = vadd.f32 %v145, %v391
    %v579 = vadd.f32 %v146, %v396
    %v580 = vadd.f32 %v147, %v396
    %v581 = vadd.f32 %v148, %v396
    %v582 = vadd.f32 %v149, %v401
    %v583 = vadd.f32 %v150, %v401
    %v584 = vadd.f32 %v151, %v401
    %v585 = vadd.f32 %v152, %v406
    %v586 = vadd.f32 %v153, %v406
    %v587 = vadd.f32 %v154, %v406
    %v588 = vadd.f32 %v155, %v411
    %v589 = vadd.f32 %v156, %v411
    %v590 = vadd.f32 %v157, %v411
    %v591 = vadd.f32 %v158, %v416
    %v592 = vadd.f32 %v159, %v416
    %v593 = vadd.f32 %v160, %v416
    %v594 = vadd.f32 %v161, %v421
    %v595 = vadd.f32 %v162, %v421
    %v596 = vadd.f32 %v163, %v421
    %v597 = vadd.f32 %v164, %v426
    %v598 = vadd.f32 %v165, %v426
    %v599 = vadd.f32 %v166, %v426
    %v600 = vadd.f32 %v167, %v431
    %v601 = vadd.f32 %v168, %v431
    %v602 = vadd.f32 %v169, %v431
    %v603 = vadd.f32 %v170, %v436
    %v604 = vadd.f32 %v171, %v436
    %v605 = vadd.f32 %v172, %v436
    %v606 = vadd.f32 %v173, %v441
    %v607 = vadd.f32 %v174, %v441
    %v608 = vadd.f32 %v175, %v441
    %v609 = vadd.f32 %v176, %v446
    %v610 = vadd.f32 %v177, %v446
    %v611 = vadd.f32 %v178, %v446
    %v612 = vadd.f32 %v179, %v451
    %v613 = vadd.f32 %v180, %v451
    %v614 = vadd.f32 %v181, %v451
    %v615 = vadd.f32 %v182, %v456
    %v616 = vadd.f32 %v183, %v456
    %v617 = vadd.f32 %v184, %v456
    %v618 = vadd.f32 %v185, %v461
    %v619 = vadd.f32 %v186, %v461
    %v620 = vadd.f32 %v187, %v461
    %v621 = vadd.f32 %v188, %v466
    %v622 = vadd.f32 %v189, %v466
    %v623 = vadd.f32 %v190, %v466
    %v624 = vadd.f32 %v191, %v471
    %v625 = vadd.f32 %v192, %v471
    %v626 = vadd.f32 %v193, %v471
    %v627 = vadd.f32 %v194, %v476
    %v628 = vadd.f32 %v195, %v476
    %v629 = vadd.f32 %v196, %v476
    %v630 = vadd.f32 %v197, %v481
    %v631 = vadd.f32 %v198, %v481
    %v632 = vadd.f32 %v199, %v481
    %v633 = vadd.f32 %v200, %v486
    %v634 = vadd.f32 %v201, %v486
    %v635 = vadd.f32 %v202, %v486
    %v636 = vadd.f32 %v203, %v491
    %v637 = vadd.f32 %v204, %v491
    %v638 = vadd.f32 %v205, %v491
    %v639 = vadd.f32 %v206, %v496
    %v640 = vadd.f32 %v207, %v496
    %v641 = vadd.f32 %v208, %v496
    %v642 = vmax.f32 %v498, 0.0
    %v643 = vmax.f32 %v499, 0.0
    %v644 = vmax.f32 %v500, 0.0
    %v645 = vmax.f32 %v501, 0.0
    %v646 = vmax.f32 %v502, 0.0
    %v647 = vmax.f32 %v503, 0.0
    %v648 = vmax.f32 %v504, 0.0
    %v649 = vmax.f32 %v505, 0.0
    %v650 = vmax.f32 %v506, 0.0
    %v651 = vmax.f32 %v507, 0.0
    %v652 = vmax.f32 %v508, 0.0
    %v653 = vmax.f32 %v509, 0.0
    %v654 = vmax.f32 %v510, 0.0
    %v655 = vmax.f32 %v511, 0.0
    %v656 = vmax.f32 %v512, 0.0
    %v657 = vmax.f32 %v513, 0.0
    %v658 = vmax.f32 %v514, 0.0
    %v659 = vmax.f32 %v515, 0.0
    %v660 = vmax.f32 %v516, 0.0
    %v661 = vmax.f32 %v517, 0.0
    %v662 = vmax.f32 %v518, 0.0
    %v663 = vmax.f32 %v519, 0.0
    %v664 = vmax.f32 %v520, 0.0
    %v665 = vmax.f32 %v521, 0.0
    %v666 = vmax.f32 %v522, 0.0
    %v667 = vmax.f32 %v523, 0.0
    %v668 = vmax.f32 %v524, 0.0
    %v669 = vmax.f32 %v525, 0.0
    %v670 = vmax.f32 %v526, 0.0
    %v671 = vmax.f32 %v527, 0.0
    %v672 = vmax.f32 %v528, 0.0
    %v673 = vmax.f32 %v529, 0.0
    %v674 = vmax.f32 %v530, 0.0
    %v675 = vmax.f32 %v531, 0.0
    %v676 = vmax.f32 %v532, 0.0
    %v677 = vmax.f32 %v533, 0.0
    %v678 = vmax.f32 %v534, 0.0
    %v679 = vmax.f32 %v535, 0.0
    %v680 = vmax.f32 %v536, 0.0
    %v681 = vmax.f32 %v537, 0.0
    %v682 = vmax.f32 %v538, 0.0
    %v683 = vmax.f32 %v539, 0.0
    %v684 = vmax.f32 %v540, 0.0
    %v685 = vmax.f32 %v541, 0.0
    %v686 = vmax.f32 %v542, 0.0
    %v687 = vmax.f32 %v543, 0.0
    %v688 = vmax.f32 %v544, 0.0
    %v689 = vmax.f32 %v545, 0.0
    %v690 = vmax.f32 %v546, 0.0
    %v691 = vmax.f32 %v547, 0.0
    %v692 = vmax.f32 %v548, 0.0
    %v693 = vmax.f32 %v549, 0.0
    %v694 = vmax.f32 %v550, 0.0
    %v695 = vmax.f32 %v551, 0.0
    %v696 = vmax.f32 %v552, 0.0
    %v697 = vmax.f32 %v553, 0.0
    %v698 = vmax.f32 %v554, 0.0
    %v699 = vmax.f32 %v555, 0.0
    %v700 = vmax.f32 %v556, 0.0
    %v701 = vmax.f32 %v557, 0.0
    %v702 = vmax.f32 %v558, 0.0
    %v703 = vmax.f32 %v559, 0.0
    %v704 = vmax.f32 %v560, 0.0
    %v705 = vmax.f32 %v561, 0.0
    %v706 = vmax.f32 %v562, 0.0
    %v707 = vmax.f32 %v563, 0.0
    %v708 = vmax.f32 %v564, 0.0
    %v709 = vmax.f32 %v565, 0.0
    %v710 = vmax.f32 %v566, 0.0
    %v711 = vmax.f32 %v567, 0.0
    %v712 = vmax.f32 %v568, 0.0
    %v713 = vmax.f32 %v569, 0.0
    %v714 = vmax.f32 %v570, 0.0
    %v715 = vmax.f32 %v571, 0.0
    %v716 = vmax.f32 %v572, 0.0
    %v717 = vmax.f32 %v573, 0.0
    %v718 = vmax.f32 %v574, 0.0
    %v719 = vmax.f32 %v575, 0.0
    %v720 = vmax.f32 %v576, 0.0
    %v721 = vmax.f32 %v577, 0.0
    %v722 = vmax.f32 %v578, 0.0
    %v723 = vmax.f32 %v579, 0.0
    %v724 = vmax.f32 %v580, 0.0
    %v725 = vmax.f32 %v581, 0.0
    %v726 = vmax.f32 %v582, 0.0
    %v727 = vmax.f32 %v583, 0.0
    %v728 = vmax.f32 %v584, 0.0
    %v729 = vmax.f32 %v585, 0.0
    %v730 = vmax.f32 %v586, 0.0
    %v731 = vmax.f32 %v587, 0.0
    %v732 = vmax.f32 %v588, 0.0
    %v733 = vmax.f32 %v589, 0.0
    %v734 = vmax.f32 %v590, 0.0
    %v735 = vmax.f32 %v591, 0.0
    %v736 = vmax.f32 %v592, 0.0
    %v737 = vmax.f32 %v593, 0.0
    %v738 = vmax.f32 %v594, 0.0
    %v739 = vmax.f32 %v595, 0.0
    %v740 = vmax.f32 %v596, 0.0
    %v741 = vmax.f32 %v597, 0.0
    %v742 = vmax.f32 %v598, 0.0
    %v743 = vmax.f32 %v599, 0.0
    %v744 = vmax.f32 %v600, 0.0
    %v745 = vmax.f32 %v601, 0.0
    %v746 = vmax.f32 %v602, 0.0
    %v747 = vmax.f32 %v603, 0.0
    %v748 = vmax.f32 %v604, 0.0
    %v749 = vmax.f32 %v605, 0.0
    %v750 = vmax.f32 %v606, 0.0
    %v751 = vmax.f32 %v607, 0.0
    %v752 = vmax.f32 %v608, 0.0
    %v753 = vmax.f32 %v609, 0.0
    %v754 = vmax.f32 %v610, 0.0
    %v755 = vmax.f32 %v611, 0.0
    %v756 = vmax.f32 %v612, 0.0
    %v757 = vmax.f32 %v613, 0.0
    %v758 = vmax.f32 %v614, 0.0
    %v759 = vmax.f32 %v615, 0.0
    %v760 = vmax.f32 %v616, 0.0
    %v761 = vmax.f32 %v617, 0.0
    %v762 = vmax.f32 %v618, 0.0
    %v763 = vmax.f32 %v619, 0.0
    %v764 = vmax.f32 %v620, 0.0
    %v765 = vmax.f32 %v621, 0.0
    %v766 = vmax.f32 %v622, 0.0
    %v767 = vmax.f32 %v623, 0.0
    %v768 = vmax.f32 %v624, 0.0
    %v769 = vmax.f32 %v625, 0.0
    %v770 = vmax.f32 %v626, 0.0
    %v771 = vmax.f32 %v627, 0.0
    %v772 = vmax.f32 %v628, 0.0
    %v773 = vmax.f32 %v629, 0.0
    %v774 = vmax.f32 %v630, 0.0
    %v775 = vmax.f32 %v631, 0.0
    %v776 = vmax.f32 %v632, 0.0
    %v777 = vmax.f32 %v633, 0.0
    %v778 = vmax.f32 %v634, 0.0
    %v779 = vmax.f32 %v635, 0.0
    %v780 = vmax.f32 %v636, 0.0
    %v781 = vmax.f32 %v637, 0.0
    %v782 = vmax.f32 %v638, 0.0
    %v783 = vmax.f32 %v639, 0.0
    %v784 = vmax.f32 %v640, 0.0
    %v785 = vmax.f32 %v641, 0.0
    %v787 = vlaneseq
    %v788 = vshrl.u32 %v787, 7
    %v789 = vsub.s32 0, %v788
    %v790 = vrot.slane %v257, %v789
    %v791 = vlaneseq
    %v792 = vshrl.u32 %v791, 7
    %v793 = vsub.s32 1, %v792
    %v794 = vrot.slane %v257, %v793
    %v795 = vlaneseq
    %v796 = vshrl.u32 %v795, 7
    %v797 = vsub.s32 2, %v796
    %v798 = vrot.slane %v257, %v797
    %v802 = vadd.f32 %v65, %v790
    %v803 = vadd.f32 %v66, %v794
    %v804 = vadd.f32 %v67, %v798
    %v805 = vadd.f32 %v68, %v790
    %v806 = vadd.f32 %v69, %v794
    %v807 = vadd.f32 %v70, %v798
    %v808 = vadd.f32 %v71, %v790
    %v809 = vadd.f32 %v72, %v794
    %v810 = vadd.f32 %v73, %v798
    %v811 = vadd.f32 %v74, %v790
    %v812 = vadd.f32 %v75, %v794
    %v813 = vadd.f32 %v76, %v798
    %v814 = vadd.f32 %v77, %v790
    %v815 = vadd.f32 %v78, %v794
    %v816 = vadd.f32 %v79, %v798
    %v817 = vadd.f32 %v80, %v790
    %v818 = vadd.f32 %v81, %v794
    %v819 = vadd.f32 %v82, %v798
    %v820 = vadd.f32 %v83, %v790
    %v821 = vadd.f32 %v84, %v794
    %v822 = vadd.f32 %v85, %v798
    %v823 = vadd.f32 %v86, %v790
    %v824 = vadd.f32 %v87, %v794
    %v825 = vadd.f32 %v88, %v798
    %v826 = vadd.f32 %v89, %v790
    %v827 = vadd.f32 %v90, %v794
    %v828 = vadd.f32 %v91, %v798
    %v829 = vadd.f32 %v92, %v790
    %v830 = vadd.f32 %v93, %v794
    %v831 = vadd.f32 %v94, %v798
    %v832 = vadd.f32 %v95, %v790
    %v833 = vadd.f32 %v96, %v794
    %v834 = vadd.f32 %v97, %v798
    %v835 = vadd.f32 %v98, %v790
    %v836 = vadd.f32 %v99, %v794
    %v837 = vadd.f32 %v100, %v798
    %v838 = vadd.f32 %v101, %v790
    %v839 = vadd.f32 %v102, %v794
    %v840 = vadd.f32 %v103, %v798
    %v841 = vadd.f32 %v104, %v790
    %v842 = vadd.f32 %v105, %v794
    %v843 = vadd.f32 %v106, %v798
    %v844 = vadd.f32 %v107, %v790
    %v845 = vadd.f32 %v108, %v794
    %v846 = vadd.f32 %v109, %v798
    %v847 = vadd.f32 %v110, %v790
    %v848 = vadd.f32 %v111, %v794
    %v849 = vadd.f32 %v112, %v798
    %v850 = vadd.f32 %v113, %v790
    %v851 = vadd.f32 %v114, %v794
    %v852 = vadd.f32 %v115, %v798
    %v853 = vadd.f32 %v116, %v790
    %v854 = vadd.f32 %v117, %v794
    %v855 = vadd.f32 %v118, %v798
    %v856 = vadd.f32 %v119, %v790
    %v857 = vadd.f32 %v120, %v794
    %v858 = vadd.f32 %v121, %v798
    %v859 = vadd.f32 %v122, %v790
    %v860 = vadd.f32 %v123, %v794
    %v861 = vadd.f32 %v124, %v798
    %v862 = vadd.f32 %v125, %v790
    %v863 = vadd.f32 %v126, %v794
    %v864 = vadd.f32 %v127, %v798
    %v865 = vadd.f32 %v128, %v790
    %v866 = vadd.f32 %v129, %v794
    %v867 = vadd.f32 %v130, %v798
    %v868 = vadd.f32 %v131, %v790
    %v869 = vadd.f32 %v132, %v794
    %v870 = vadd.f32 %v133, %v798
    %v871 = vadd.f32 %v134, %v790
    %v872 = vadd.f32 %v135, %v794
    %v873 = vadd.f32 %v136, %v798
    %v874 = vadd.f32 %v137, %v790
    %v875 = vadd.f32 %v138, %v794
    %v876 = vadd.f32 %v139, %v798
    %v877 = vadd.f32 %v140, %v790
    %v878 = vadd.f32 %v141, %v794
    %v879 = vadd.f32 %v142, %v798
    %v880 = vadd.f32 %v143, %v790
    %v881 = vadd.f32 %v144, %v794
    %v882 = vadd.f32 %v145, %v798
    %v883 = vadd.f32 %v146, %v790
    %v884 = vadd.f32 %v147, %v794
    %v885 = vadd.f32 %v148, %v798
    %v886 = vadd.f32 %v149, %v790
    %v887 = vadd.f32 %v150, %v794
    %v888 = vadd.f32 %v151, %v798
    %v889 = vadd.f32 %v152, %v790
    %v890 = vadd.f32 %v153, %v794
    %v891 = vadd.f32 %v154, %v798
    %v892 = vadd.f32 %v155, %v790
    %v893 = vadd.f32 %v156, %v794
    %v894 = vadd.f32 %v157, %v798
    %v895 = vadd.f32 %v158, %v790
    %v896 = vadd.f32 %v159, %v794
    %v897 = vadd.f32 %v160, %v798
    %v898 = vadd.f32 %v161, %v790
    %v899 = vadd.f32 %v162, %v794
    %v900 = vadd.f32 %v163, %v798
    %v901 = vadd.f32 %v164, %v790
    %v902 = vadd.f32 %v165, %v794
    %v903 = vadd.f32 %v166, %v798
    %v904 = vadd.f32 %v167, %v790
    %v905 = vadd.f32 %v168, %v794
    %v906 = vadd.f32 %v169, %v798
    %v907 = vadd.f32 %v170, %v790
    %v908 = vadd.f32 %v171, %v794
    %v909 = vadd.f32 %v172, %v798
    %v910 = vadd.f32 %v173, %v790
    %v911 = vadd.f32 %v174, %v794
    %v912 = vadd.f32 %v175, %v798
    %v913 = vadd.f32 %v176, %v790
    %v914 = vadd.f32 %v177, %v794
    %v915 = vadd.f32 %v178, %v798
    %v916 = vadd.f32 %v179, %v790
    %v917 = vadd.f32 %v180, %v794
    %v918 = vadd.f32 %v181, %v798
    %v919 = vadd.f32 %v182, %v790
    %v920 = vadd.f32 %v183, %v794
    %v921 = vadd.f32 %v184, %v798
    %v922 = vadd.f32 %v185, %v790
    %v923 = vadd.f32 %v186, %v794
    %v924 = vadd.f32 %v187, %v798
    %v925 = vadd.f32 %v188, %v790
    %v926 = vadd.f32 %v189, %v794
    %v927 = vadd.f32 %v190, %v798
    %v928 = vadd.f32 %v191, %v790
    %v929 = vadd.f32 %v192, %v794
    %v930 = vadd.f32 %v193, %v798
    %v931 = vadd.f32 %v194, %v790
    %v932 = vadd.f32 %v195, %v794
    %v933 = vadd.f32 %v196, %v798
    %v934 = vadd.f32 %v197, %v790
    %v935 = vadd.f32 %v198, %v794
    %v936 = vadd.f32 %v199, %v798
    %v937 = vadd.f32 %v200, %v790
    %v938 = vadd.f32 %v201, %v794
    %v939 = vadd.f32 %v202, %v798
    %v940 = vadd.f32 %v203, %v790
    %v941 = vadd.f32 %v204, %v794
    %v942 = vadd.f32 %v205, %v798
    %v943 = vadd.f32 %v206, %v790
    %v944 = vadd.f32 %v207, %v794
    %v945 = vadd.f32 %v208, %v798
    %v946 = vmax.f32 %v802, 0.0
    %v947 = vmax.f32 %v803, 0.0
    %v948 = vmax.f32 %v804, 0.0
    %v949 = vmax.f32 %v805, 0.0
    %v950 = vmax.f32 %v806, 0.0
    %v951 = vmax.f32 %v807, 0.0
    %v952 = vmax.f32 %v808, 0.0
    %v953 = vmax.f32 %v809, 0.0
    %v954 = vmax.f32 %v810, 0.0
    %v955 = vmax.f32 %v811, 0.0
    %v956 = vmax.f32 %v812, 0.0
    %v957 = vmax.f32 %v813, 0.0
    %v958 = vmax.f32 %v814, 0.0
    %v959 = vmax.f32 %v815, 0.0
    %v960 = vmax.f32 %v816, 0.0
    %v961 = vmax.f32 %v817, 0.0
    %v962 = vmax.f32 %v818, 0.0
    %v963 = vmax.f32 %v819, 0.0
    %v964 = vmax.f32 %v820, 0.0
    %v965 = vmax.f32 %v821, 0.0
    %v966 = vmax.f32 %v822, 0.0
    %v967 = vmax.f32 %v823, 0.0
    %v968 = vmax.f32 %v824, 0.0
    %v969 = vmax.f32 %v825, 0.0
    %v970 = vmax.f32 %v826, 0.0
    %v971 = vmax.f32 %v827, 0.0
    %v972 = vmax.f32 %v828, 0.0
    %v973 = vmax.f32 %v829, 0.0
    %v974 = vmax.f32 %v830, 0.0
    %v975 = vmax.f32 %v831, 0.0
    %v976 = vmax.f32 %v832, 0.0
    %v977 = vmax.f32 %v833, 0.0
    %v978 = vmax.f32 %v834, 0.0
    %v979 = vmax.f32 %v835, 0.0
    %v980 = vmax.f32 %v836, 0.0
    %v981 = vmax.f32 %v837, 0.0
    %v982 = vmax.f32 %v838, 0.0
    %v983 = vmax.f32 %v839, 0.0
    %v984 = vmax.f32 %v840, 0.0
    %v985 = vmax.f32 %v841, 0.0
    %v986 = vmax.f32 %v842, 0.0
    %v987 = vmax.f32 %v843, 0.0
    %v988 = vmax.f32 %v844, 0.0
    %v989 = vmax.f32 %v845, 0.0
    %v990 = vmax.f32 %v846, 0.0
    %v991 = vmax.f32 %v847, 0.0
    %v992 = vmax.f32 %v848, 0.0
    %v993 = vmax.f32 %v849, 0.0
    %v994 = vmax.f32 %v850, 0.0
    %v995 = vmax.f32 %v851, 0.0
    %v996 = vmax.f32 %v852, 0.0
    %v997 = vmax.f32 %v853, 0.0
    %v998 = vmax.f32 %v854, 0.0
    %v999 = vmax.f32 %v855, 0.0
    %v1000 = vmax.f32 %v856, 0.0
    %v1001 = vmax.f32 %v857, 0.0
    %v1002 = vmax.f32 %v858, 0.0
    %v1003 = vmax.f32 %v859, 0.0
    %v1004 = vmax.f32 %v860, 0.0
    %v1005 = vmax.f32 %v861, 0.0
    %v1006 = vmax.f32 %v862, 0.0
    %v1007 = vmax.f32 %v863, 0.0
    %v1008 = vmax.f32 %v864, 0.0
    %v1009 = vmax.f32 %v865, 0.0
    %v1010 = vmax.f32 %v866, 0.0
    %v1011 = vmax.f32 %v867, 0.0
    %v1012 = vmax.f32 %v868, 0.0
    %v1013 = vmax.f32 %v869, 0.0
    %v1014 = vmax.f32 %v870, 0.0
    %v1015 = vmax.f32 %v871, 0.0
    %v1016 = vmax.f32 %v872, 0.0
    %v1017 = vmax.f32 %v873, 0.0
    %v1018 = vmax.f32 %v874, 0.0
    %v1019 = vmax.f32 %v875, 0.0
    %v1020 = vmax.f32 %v876, 0.0
    %v1021 = vmax.f32 %v877, 0.0
    %v1022 = vmax.f32 %v878, 0.0
    %v1023 = vmax.f32 %v879, 0.0
    %v1024 = vmax.f32 %v880, 0.0
    %v1025 = vmax.f32 %v881, 0.0
    %v1026 = vmax.f32 %v882, 0.0
    %v1027 = vmax.f32 %v883, 0.0
    %v1028 = vmax.f32 %v884, 0.0
    %v1029 = vmax.f32 %v885, 0.0
    %v1030 = vmax.f32 %v886, 0.0
    %v1031 = vmax.f32 %v887, 0.0
    %v1032 = vmax.f32 %v888, 0.0
    %v1033 = vmax.f32 %v889, 0.0
    %v1034 = vmax.f32 %v890, 0.0
    %v1035 = vmax.f32 %v891, 0.0
    %v1036 = vmax.f32 %v892, 0.0
    %v1037 = vmax.f32 %v893, 0.0
    %v1038 = vmax.f32 %v894, 0.0
    %v1039 = vmax.f32 %v895, 0.0
    %v1040 = vmax.f32 %v896, 0.0
    %v1041 = vmax.f32 %v897, 0.0
    %v1042 = vmax.f32 %v898, 0.0
    %v1043 = vmax.f32 %v899, 0.0
    %v1044 = vmax.f32 %v900, 0.0
    %v1045 = vmax.f32 %v901, 0.0
    %v1046 = vmax.f32 %v902, 0.0
    %v1047 = vmax.f32 %v903, 0.0
    %v1048 = vmax.f32 %v904, 0.0
    %v1049 = vmax.f32 %v905, 0.0
    %v1050 = vmax.f32 %v906, 0.0
    %v1051 = vmax.f32 %v907, 0.0
    %v1052 = vmax.f32 %v908, 0.0
    %v1053 = vmax.f32 %v909, 0.0
    %v1054 = vmax.f32 %v910, 0.0
    %v1055 = vmax.f32 %v911, 0.0
    %v1056 = vmax.f32 %v912, 0.0
    %v1057 = vmax.f32 %v913, 0.0
    %v1058 = vmax.f32 %v914, 0.0
    %v1059 = vmax.f32 %v915, 0.0
    %v1060 = vmax.f32 %v916, 0.0
    %v1061 = vmax.f32 %v917, 0.0
    %v1062 = vmax.f32 %v918, 0.0
    %v1063 = vmax.f32 %v919, 0.0
    %v1064 = vmax.f32 %v920, 0.0
    %v1065 = vmax.f32 %v921, 0.0
    %v1066 = vmax.f32 %v922, 0.0
    %v1067 = vmax.f32 %v923, 0.0
    %v1068 = vmax.f32 %v924, 0.0
    %v1069 = vmax.f32 %v925, 0.0
    %v1070 = vmax.f32 %v926, 0.0
    %v1071 = vmax.f32 %v927, 0.0
    %v1072 = vmax.f32 %v928, 0.0
    %v1073 = vmax.f32 %v929, 0.0
    %v1074 = vmax.f32 %v930, 0.0
    %v1075 = vmax.f32 %v931, 0.0
    %v1076 = vmax.f32 %v932, 0.0
    %v1077 = vmax.f32 %v933, 0.0
    %v1078 = vmax.f32 %v934, 0.0
    %v1079 = vmax.f32 %v935, 0.0
    %v1080 = vmax.f32 %v936, 0.0
    %v1081 = vmax.f32 %v937, 0.0
    %v1082 = vmax.f32 %v938, 0.0
    %v1083 = vmax.f32 %v939, 0.0
    %v1084 = vmax.f32 %v940, 0.0
    %v1085 = vmax.f32 %v941, 0.0
    %v1086 = vmax.f32 %v942, 0.0
    %v1087 = vmax.f32 %v943, 0.0
    %v1088 = vmax.f32 %v944, 0.0
    %v1089 = vmax.f32 %v945, 0.0
    %v1090 = vadd.f32 %v642, %v946
    %v1091 = vadd.f32 %v643, %v947
    %v1092 = vadd.f32 %v644, %v948
    %v1093 = vadd.f32 %v645, %v949
    %v1094 = vadd.f32 %v646, %v950
    %v1095 = vadd.f32 %v647, %v951
    %v1096 = vadd.f32 %v648, %v952
    %v1097 = vadd.f32 %v649, %v953
    %v1098 = vadd.f32 %v650, %v954
    %v1099 = vadd.f32 %v651, %v955
    %v1100 = vadd.f32 %v652, %v956
    %v1101 = vadd.f32 %v653, %v957
    %v1102 = vadd.f32 %v654, %v958
    %v1103 = vadd.f32 %v655, %v959
    %v1104 = vadd.f32 %v656, %v960
    %v1105 = vadd.f32 %v657, %v961
    %v1106 = vadd.f32 %v658, %v962
    %v1107 = vadd.f32 %v659, %v963
    %v1108 = vadd.f32 %v660, %v964
    %v1109 = vadd.f32 %v661, %v965
    %v1110 = vadd.f32 %v662, %v966
    %v1111 = vadd.f32 %v663, %v967
    %v1112 = vadd.f32 %v664, %v968
    %v1113 = vadd.f32 %v665, %v969
    %v1114 = vadd.f32 %v666, %v970
    %v1115 = vadd.f32 %v667, %v971
    %v1116 = vadd.f32 %v668, %v972
    %v1117 = vadd.f32 %v669, %v973
    %v1118 = vadd.f32 %v670, %v974
    %v1119 = vadd.f32 %v671, %v975
    %v1120 = vadd.f32 %v672, %v976
    %v1121 = vadd.f32 %v673, %v977
    %v1122 = vadd.f32 %v674, %v978
    %v1123 = vadd.f32 %v675, %v979
    %v1124 = vadd.f32 %v676, %v980
    %v1125 = vadd.f32 %v677, %v981
    %v1126 = vadd.f32 %v678, %v982
    %v1127 = vadd.f32 %v679, %v983
    %v1128 = vadd.f32 %v680, %v984
    %v1129 = vadd.f32 %v681, %v985
    %v1130 = vadd.f32 %v682, %v986
    %v1131 = vadd.f32 %v683, %v987
    %v1132 = vadd.f32 %v684, %v988
    %v1133 = vadd.f32 %v685, %v989
    %v1134 = vadd.f32 %v686, %v990
    %v1135 = vadd.f32 %v687, %v991
    %v1136 = vadd.f32 %v688, %v992
    %v1137 = vadd.f32 %v689, %v993
    %v1138 = vadd.f32 %v690, %v994
    %v1139 = vadd.f32 %v691, %v995
    %v1140 = vadd.f32 %v692, %v996
    %v1141 = vadd.f32 %v693, %v997
    %v1142 = vadd.f32 %v694, %v998
    %v1143 = vadd.f32 %v695, %v999
    %v1144 = vadd.f32 %v696, %v1000
    %v1145 = vadd.f32 %v697, %v1001
    %v1146 = vadd.f32 %v698, %v1002
    %v1147 = vadd.f32 %v699, %v1003
    %v1148 = vadd.f32 %v700, %v1004
    %v1149 = vadd.f32 %v701, %v1005
    %v1150 = vadd.f32 %v702, %v1006
    %v1151 = vadd.f32 %v703, %v1007
    %v1152 = vadd.f32 %v704, %v1008
    %v1153 = vadd.f32 %v705, %v1009
    %v1154 = vadd.f32 %v706, %v1010
    %v1155 = vadd.f32 %v707, %v1011
    %v1156 = vadd.f32 %v708, %v1012
    %v1157 = vadd.f32 %v709, %v1013
    %v1158 = vadd.f32 %v710, %v1014
    %v1159 = vadd.f32 %v711, %v1015
    %v1160 = vadd.f32 %v712, %v1016
    %v1161 = vadd.f32 %v713, %v1017
    %v1162 = vadd.f32 %v714, %v1018
    %v1163 = vadd.f32 %v715, %v1019
    %v1164 = vadd.f32 %v716, %v1020
    %v1165 = vadd.f32 %v717, %v1021
    %v1166 = vadd.f32 %v718, %v1022
    %v1167 = vadd.f32 %v719, %v1023
    %v1168 = vadd.f32 %v720, %v1024
    %v1169 = vadd.f32 %v721, %v1025
    %v1170 = vadd.f32 %v722, %v1026
    %v1171 = vadd.f32 %v723, %v1027
    %v1172 = vadd.f32 %v724, %v1028
    %v1173 = vadd.f32 %v725, %v1029
    %v1174 = vadd.f32 %v726, %v1030
    %v1175 = vadd.f32 %v727, %v1031
    %v1176 = vadd.f32 %v728, %v1032
    %v1177 = vadd.f32 %v729, %v1033
    %v1178 = vadd.f32 %v730, %v1034
    %v1179 = vadd.f32 %v731, %v1035
    %v1180 = vadd.f32 %v732, %v1036
    %v1181 = vadd.f32 %v733, %v1037
    %v1182 = vadd.f32 %v734, %v1038
    %v1183 = vadd.f32 %v735, %v1039
    %v1184 = vadd.f32 %v736, %v1040
    %v1185 = vadd.f32 %v737, %v1041
    %v1186 = vadd.f32 %v738, %v1042
    %v1187 = vadd.f32 %v739, %v1043
    %v1188 = vadd.f32 %v740, %v1044
    %v1189 = vadd.f32 %v741, %v1045
    %v1190 = vadd.f32 %v742, %v1046
    %v1191 = vadd.f32 %v743, %v1047
    %v1192 = vadd.f32 %v744, %v1048
    %v1193 = vadd.f32 %v745, %v1049
    %v1194 = vadd.f32 %v746, %v1050
    %v1195 = vadd.f32 %v747, %v1051
    %v1196 = vadd.f32 %v748, %v1052
    %v1197 = vadd.f32 %v749, %v1053
    %v1198 = vadd.f32 %v750, %v1054
    %v1199 = vadd.f32 %v751, %v1055
    %v1200 = vadd.f32 %v752, %v1056
    %v1201 = vadd.f32 %v753, %v1057
    %v1202 = vadd.f32 %v754, %v1058
    %v1203 = vadd.f32 %v755, %v1059
    %v1204 = vadd.f32 %v756, %v1060
    %v1205 = vadd.f32 %v757, %v1061
    %v1206 = vadd.f32 %v758, %v1062
    %v1207 = vadd.f32 %v759, %v1063
    %v1208 = vadd.f32 %v760, %v1064
    %v1209 = vadd.f32 %v761, %v1065
    %v1210 = vadd.f32 %v762, %v1066
    %v1211 = vadd.f32 %v763, %v1067
    %v1212 = vadd.f32 %v764, %v1068
    %v1213 = vadd.f32 %v765, %v1069
    %v1214 = vadd.f32 %v766, %v1070
    %v1215 = vadd.f32 %v767, %v1071
    %v1216 = vadd.f32 %v768, %v1072
    %v1217 = vadd.f32 %v769, %v1073
    %v1218 = vadd.f32 %v770, %v1074
    %v1219 = vadd.f32 %v771, %v1075
    %v1220 = vadd.f32 %v772, %v1076
    %v1221 = vadd.f32 %v773, %v1077
    %v1222 = vadd.f32 %v774, %v1078
    %v1223 = vadd.f32 %v775, %v1079
    %v1224 = vadd.f32 %v776, %v1080
    %v1225 = vadd.f32 %v777, %v1081
    %v1226 = vadd.f32 %v778, %v1082
    %v1227 = vadd.f32 %v779, %v1083
    %v1228 = vadd.f32 %v780, %v1084
    %v1229 = vadd.f32 %v781, %v1085
    %v1230 = vadd.f32 %v782, %v1086
    %v1231 = vadd.f32 %v783, %v1087
    %v1232 = vadd.f32 %v784, %v1088
    %v1233 = vadd.f32 %v785, %v1089
    %v1234 = vadd.f32 %v1090, %v1093
    %v1235 = vadd.f32 %v1091, %v1094
    %v1236 = vadd.f32 %v1092, %v1095
    %v1237 = vadd.f32 %v1234, %v1096
    %v1238 = vadd.f32 %v1235, %v1097
    %v1239 = vadd.f32 %v1236, %v1098
    %v1240 = vadd.f32 %v1237, %v1099
    %v1241 = vadd.f32 %v1238, %v1100
    %v1242 = vadd.f32 %v1239, %v1101
    %v1243 = vadd.f32 %v1240, %v1102
    %v1244 = vadd.f32 %v1241, %v1103
    %v1245 = vadd.f32 %v1242, %v1104
    %v1246 = vadd.f32 %v1243, %v1105
    %v1247 = vadd.f32 %v1244, %v1106
    %v1248 = vadd.f32 %v1245, %v1107
    %v1249 = vadd.f32 %v1246, %v1108
    %v1250 = vadd.f32 %v1247, %v1109
    %v1251 = vadd.f32 %v1248, %v1110
    %v1252 = vadd.f32 %v1249, %v1111
    %v1253 = vadd.f32 %v1250, %v1112
    %v1254 = vadd.f32 %v1251, %v1113
    %v1255 = vadd.f32 %v1252, %v1114
    %v1256 = vadd.f32 %v1253, %v1115
    %v1257 = vadd.f32 %v1254, %v1116
    %v1258 = vadd.f32 %v1255, %v1117
    %v1259 = vadd.f32 %v1256, %v1118
    %v1260 = vadd.f32 %v1257, %v1119
    %v1261 = vadd.f32 %v1258, %v1120
    %v1262 = vadd.f32 %v1259, %v1121
    %v1263 = vadd.f32 %v1260, %v1122
    %v1264 = vadd.f32 %v1261, %v1123
    %v1265 = vadd.f32 %v1262, %v1124
    %v1266 = vadd.f32 %v1263, %v1125
    %v1267 = vadd.f32 %v1264, %v1126
    %v1268 = vadd.f32 %v1265, %v1127
    %v1269 = vadd.f32 %v1266, %v1128
    %v1270 = vadd.f32 %v1267, %v1129
    %v1271 = vadd.f32 %v1268, %v1130
    %v1272 = vadd.f32 %v1269, %v1131
    %v1273 = vadd.f32 %v1270, %v1132
    %v1274 = vadd.f32 %v1271, %v1133
    %v1275 = vadd.f32 %v1272, %v1134
    %v1276 = vadd.f32 %v1273, %v1135
    %v1277 = vadd.f32 %v1274, %v1136
    %v1278 = vadd.f32 %v1275, %v1137
    %v1279 = vadd.f32 %v1276, %v1138
    %v1280 = vadd.f32 %v1277, %v1139
    %v1281 = vadd.f32 %v1278, %v1140
    %v1282 = vadd.f32 %v1279, %v1141
    %v1283 = vadd.f32 %v1280, %v1142
    %v1284 = vadd.f32 %v1281, %v1143
    %v1285 = vadd.f32 %v1282, %v1144
    %v1286 = vadd.f32 %v1283, %v1145
    %v1287 = vadd.f32 %v1284, %v1146
    %v1288 = vadd.f32 %v1285, %v1147
    %v1289 = vadd.f32 %v1286, %v1148
    %v1290 = vadd.f32 %v1287, %v1149
    %v1291 = vadd.f32 %v1288, %v1150
    %v1292 = vadd.f32 %v1289, %v1151
    %v1293 = vadd.f32 %v1290, %v1152
    %v1294 = vadd.f32 %v1291, %v1153
    %v1295 = vadd.f32 %v1292, %v1154
    %v1296 = vadd.f32 %v1293, %v1155
    %v1297 = vadd.f32 %v1294, %v1156
    %v1298 = vadd.f32 %v1295, %v1157
    %v1299 = vadd.f32 %v1296, %v1158
    %v1300 = vadd.f32 %v1297, %v1159
    %v1301 = vadd.f32 %v1298, %v1160
    %v1302 = vadd.f32 %v1299, %v1161
    %v1303 = vadd.f32 %v1300, %v1162
    %v1304 = vadd.f32 %v1301, %v1163
    %v1305 = vadd.f32 %v1302, %v1164
    %v1306 = vadd.f32 %v1303, %v1165
    %v1307 = vadd.f32 %v1304, %v1166
    %v1308 = vadd.f32 %v1305, %v1167
    %v1309 = vadd.f32 %v1306, %v1168
    %v1310 = vadd.f32 %v1307, %v1169
    %v1311 = vadd.f32 %v1308, %v1170
    %v1312 = vadd.f32 %v1309, %v1171
    %v1313 = vadd.f32 %v1310, %v1172
    %v1314 = vadd.f32 %v1311, %v1173
    %v1315 = vadd.f32 %v1312, %v1174
    %v1316 = vadd.f32 %v1313, %v1175
    %v1317 = vadd.f32 %v1314, %v1176
    %v1318 = vadd.f32 %v1315, %v1177
    %v1319 = vadd.f32 %v1316, %v1178
    %v1320 = vadd.f32 %v1317, %v1179
    %v1321 = vadd.f32 %v1318, %v1180
    %v1322 = vadd.f32 %v1319, %v1181
    %v1323 = vadd.f32 %v1320, %v1182
    %v1324 = vadd.f32 %v1321, %v1183
    %v1325 = vadd.f32 %v1322, %v1184
    %v1326 = vadd.f32 %v1323, %v1185
    %v1327 = vadd.f32 %v1324, %v1186
    %v1328 = vadd.f32 %v1325, %v1187
    %v1329 = vadd.f32 %v1326, %v1188
    %v1330 = vadd.f32 %v1327, %v1189
    %v1331 = vadd.f32 %v1328, %v1190
    %v1332 = vadd.f32 %v1329, %v1191
    %v1333 = vadd.f32 %v1330, %v1192
    %v1334 = vadd.f32 %v1331, %v1193
    %v1335 = vadd.f32 %v1332, %v1194
    %v1336 = vadd.f32 %v1333, %v1195
    %v1337 = vadd.f32 %v1334, %v1196
    %v1338 = vadd.f32 %v1335, %v1197
    %v1339 = vadd.f32 %v1336, %v1198
    %v1340 = vadd.f32 %v1337, %v1199
    %v1341 = vadd.f32 %v1338, %v1200
    %v1342 = vadd.f32 %v1339, %v1201
    %v1343 = vadd.f32 %v1340, %v1202
    %v1344 = vadd.f32 %v1341, %v1203
    %v1345 = vadd.f32 %v1342, %v1204
    %v1346 = vadd.f32 %v1343, %v1205
    %v1347 = vadd.f32 %v1344, %v1206
    %v1348 = vadd.f32 %v1345, %v1207
    %v1349 = vadd.f32 %v1346, %v1208
    %v1350 = vadd.f32 %v1347, %v1209
    %v1351 = vadd.f32 %v1348, %v1210
    %v1352 = vadd.f32 %v1349, %v1211
    %v1353 = vadd.f32 %v1350, %v1212
    %v1354 = vadd.f32 %v1351, %v1213
    %v1355 = vadd.f32 %v1352, %v1214
    %v1356 = vadd.f32 %v1353, %v1215
    %v1357 = vadd.f32 %v1354, %v1216
    %v1358 = vadd.f32 %v1355, %v1217
    %v1359 = vadd.f32 %v1356, %v1218
    %v1360 = vadd.f32 %v1357, %v1219
    %v1361 = vadd.f32 %v1358, %v1220
    %v1362 = vadd.f32 %v1359, %v1221
    %v1363 = vadd.f32 %v1360, %v1222
    %v1364 = vadd.f32 %v1361, %v1223
    %v1365 = vadd.f32 %v1362, %v1224
    %v1366 = vadd.f32 %v1363, %v1225
    %v1367 = vadd.f32 %v1364, %v1226
    %v1368 = vadd.f32 %v1365, %v1227
    %v1369 = vadd.f32 %v1366, %v1228
    %v1370 = vadd.f32 %v1367, %v1229
    %v1371 = vadd.f32 %v1368, %v1230
    %v1372 = vadd.f32 %v1369, %v1231
    %v1373 = vadd.f32 %v1370, %v1232
    %v1374 = vadd.f32 %v1371, %v1233
    %v1375 = vld [vmem:[#allocation2] sm:$0xff]
    %v1376 = vld [vmem:[#allocation2 + $0x8] sm:$0xff]
    %v1377 = vld [vmem:[#allocation2 + $0x10] sm:$0xff]
    %v1378 = vadd.f32 %v1375, %v1372
    %v1379 = vadd.f32 %v1376, %v1373
    %v1380 = vadd.f32 %v1377, %v1374
    %1381 = vst [vmem:[#allocation2] sm:$0xff] %v1378
    %1382 = vst [vmem:[#allocation2 + $0x8] sm:$0xff] %v1379
    %1383 = vst [vmem:[#allocation2 + $0x10] sm:$0xff] %v1380
    // Predicated region
    $region22: #{tpu_custom_call.1} parent=1 // pred_check
      %p1384 = pneg %p58
    $region23: #{tpu_custom_call.1} parent=1 // pred_check_branch
      %1386 = sbr.rel (%p1384) target = $region25
    $region24: #{tpu_custom_call.1} parent=1 // pred_region
      %v1387 = vld [vmem:[#allocation2] sm:$0xff]
      %v1388 = vld [vmem:[#allocation2 + $0x8] sm:$0xff]
      %v1389 = vld [vmem:[#allocation2 + $0x10] sm:$0xff]
      %v1390 = vadd.f32 %v1387, %v1388
      %v1391 = vadd.f32 %v1390, %v1389
      %1392 = vadd.xlane.f32.xlu0 %v1391
      %v1393 = vpop.xlane.xlu0 %1392
      %v1394 = vrot.slane %v1393, 4
      %v1395 = vadd.f32 %v1393, %v1394
      %v1396 = vrot.slane %v1395, 2
      %v1397 = vadd.f32 %v1395, %v1396
      %v1398 = vrot.slane %v1397, 1
      %v1399 = vadd.f32 %v1397, %v1398
      %vm1400 = vcmask 0
      %1401 = vst.msk [vmem:[#allocation6] sm:$0x1] %vm1400, %v1399
    $region25: #{tpu_custom_call.1} parent=1 // pred_fallthru
      _
    // Predicated region
    $region26: #{tpu_custom_call.1} parent=1 // pred_check
      _
    $region27: #{tpu_custom_call.1} parent=1 // pred_check_branch
      %1403 = sbr.rel (0) target = $region29
    $region28: #{tpu_custom_call.1} parent=1 // pred_region
      %s1405 = ssub.s32 16, 16
      %1406 = vsyncadd [#allocation5], %s1405
      %s1408 = sshll.u32 [#allocation6], 4
      %s1409 = int_to_ptr.vmem [resolvable:$true] %s1408
      %1411 = dma.vmem_to_hbm [thread:$0]  %s1409, 16, %s3, [#allocation5]
    $region29: #{tpu_custom_call.1} parent=1 // pred_fallthru
      _
    // Predicated region
    $region30: #{tpu_custom_call.1} parent=1 // pred_check
      _
    $region31: #{tpu_custom_call.1} parent=1 // pred_check_branch
      %1413 = sbr.rel (0) target = $region33
    $region32: #{tpu_custom_call.1} parent=1 // pred_region
      %1414 = dma.done [#allocation5], 16
    $region33: #{tpu_custom_call.1} parent=1 // pred_fallthru
      _
    %1415 = vsyncpa [#allocation4], 1
    %1416 = vsyncpa [#allocation5], 1

</llo_original>
